<compile_context>
chip_gen: v5e
topology: v5e:2x2
jax: 0.10.0
libtpu: 0.0.40
codegen_flags: <defaults>
</compile_context>

<pallas_src>
import functools

import jax
import jax.numpy as jnp
from jax.experimental import pallas as pl
from jax.experimental.pallas import tpu as pltpu


# ----------------------- generation-aware configuration ---------------------

def _vmem_capacity_bytes():
    try:
        return int(pltpu.get_tpu_info().vmem_capacity_bytes)
    except Exception:
        return 64 << 20  # conservative (v7x-like) fallback


_BIG_VMEM = _vmem_capacity_bytes() >= (100 << 20)   # v5e/v6e: 128 MiB, v7x: 64 MiB
if _BIG_VMEM:
    _TM_CAP, _TN_CAP, _TK_CAP, _VMEM_LIMIT = 512, 2048, 2048, 64 << 20
else:
    _TM_CAP, _TN_CAP, _TK_CAP, _VMEM_LIMIT = 256, 512, 2048, 32 << 20


# ----------------------------- Pallas kernels ------------------------------

def _matmul_bias_act_kernel(a_ref, b_ref, bias_ref, o_ref, acc_ref, *, relu):
    """Batched tiled matmul: out[n] = act(A @ B[n] + bias).

    grid = (N, M/tm, S/tn, K/tk); the K axis is the reduction ("arbitrary").
    The f32 accumulator is initialised with the broadcast bias at k==0, so the
    finalize branch is only (ReLU +) cast.
    """
    @pl.when(pl.program_id(3) == 0)
    def _():
        acc_ref[...] = jnp.broadcast_to(bias_ref[...], acc_ref.shape)

    acc_ref[...] += jnp.dot(a_ref[...], b_ref[...],
                            preferred_element_type=jnp.float32)

    @pl.when(pl.program_id(3) == pl.num_programs(3) - 1)
    def _():
        r = acc_ref[...]
        if relu:
            r = jnp.maximum(r, 0.0)
        o_ref[...] = r.astype(o_ref.dtype)


def _resize_heads_kernel(lo_ref, la_ref, ah_ref, awt_ref, o_ref):
    """Separable bilinear resize for both heads of one sample.

    lo_ref/la_ref: (nc, Ho, Wo) bf16 logits ('out' / 'aux')
    ah_ref:        (H, Ho)      bf16 row-interpolation matrix
    awt_ref:       (Wo, W)      bf16 transposed column-interpolation matrix
    o_ref:         (2, nc, H, W) f32
    Both steps run on the MXU as channel-batched matmuls (no reshapes /
    transposes inside the kernel), bf16 operands with f32 accumulation.
    """
    nc, Ho, Wo = lo_ref.shape
    H = ah_ref.shape[0]
    W = awt_ref.shape[1]
    awt_b = jnp.broadcast_to(awt_ref[...], (nc, Wo, W))   # shared by both heads
    ah_b = jnp.broadcast_to(ah_ref[...], (nc, H, Ho))

    for h, l_ref in ((0, lo_ref), (1, la_ref)):
        # columns: (nc, Ho, Wo) @ (nc, Wo, W) -> (nc, Ho, W)
        t = jax.lax.dot_general(l_ref[...], awt_b,
                                (((2,), (1,)), ((0,), (0,))),
                                preferred_element_type=jnp.float32)
        t = t.astype(jnp.bfloat16)
        # rows: (nc, H, Ho) @ (nc, Ho, W) -> (nc, H, W)
        o_ref[h] = jax.lax.dot_general(ah_b, t,
                                       (((2,), (1,)), ((0,), (0,))),
                                       preferred_element_type=jnp.float32)


# ----------------------------- kernel wrappers ------------------------------

def _pick_tile(dim, cap, align):
    """Largest tile <= cap that divides dim and respects (8,128) alignment;
    full dim (always legal as a block) if dim <= cap or no divisor exists."""
    if dim <= cap:
        return dim
    t = (cap // align) * align
    while t >= align:
        if dim % t == 0:
            return t
        t -= align
    return dim  # NOTE: may exceed cap for awkward dims; fine for our shapes.


def matmul_bias_act(a, b, bias, *, relu):
    """out[n] = act(a @ b[n] + bias[:, None]).

    a: (M, K), b: (N, K, S), bias: (M,)  ->  (N, M, S) bf16.
    bf16 operands, f32 accumulation, bf16 output (intermediates are consumed
    in bf16 downstream).  Grid (N, M/tm, S/tn, K/tk) with N/M/S "parallel".
    """
    M, K = a.shape
    Nb, K2, S = b.shape
    assert K == K2
    tm = _pick_tile(M, _TM_CAP, 8)
    tn = _pick_tile(S, _TN_CAP, 128)
    tk = _pick_tile(K, _TK_CAP, 128)
    grid = (Nb, M // tm, S // tn, K // tk)
    n_i, n_j = M // tm, S // tn

    return pl.pallas_call(
        functools.partial(_matmul_bias_act_kernel, relu=relu),
        out_shape=jax.ShapeDtypeStruct((Nb, M, S), jnp.bfloat16),
        grid=grid,
        in_specs=[
            pl.BlockSpec((tm, tk), lambda n, i, j, k: (i, k)),
            pl.BlockSpec((None, tk, tn), lambda n, i, j, k: (n, k, j)),
            pl.BlockSpec((tm, 1), lambda n, i, j, k: (i, 0)),
        ],
        out_specs=pl.BlockSpec((None, tm, tn), lambda n, i, j, k: (n, i, j)),
        scratch_shapes=[pltpu.VMEM((tm, tn), jnp.float32)],
        compiler_params=pltpu.CompilerParams(
            dimension_semantics=("parallel", "parallel", "parallel", "arbitrary"),
            vmem_limit_bytes=_VMEM_LIMIT,
        ),
        cost_estimate=pl.CostEstimate(
            flops=2 * Nb * M * S * K,
            transcendentals=0,
            bytes_accessed=(M * K * 2) * Nb * n_j          # A re-read per (n, j)
                           + (Nb * K * S * 2) * n_i        # B re-read per i
                           + Nb * M * S * 2                # bf16 output
                           + M * 4 * Nb * n_j,             # bias
        ),
    )(a.astype(jnp.bfloat16), b.astype(jnp.bfloat16),
      bias.reshape(M, 1).astype(jnp.float32))


def bilinear_resize_heads(logits_out, logits_aux, ah, awt):
    """Both heads' separable bilinear resizes in one pallas_call.

    logits_out/logits_aux: (N, nc, Ho, Wo) bf16
    ah: (H, Ho) ; awt: (Wo, W)
    returns (N, 2, nc, H, W) f32.
    """
    Nb, nc, Ho, Wo = logits_out.shape
    H = ah.shape[0]
    W = awt.shape[1]

    return pl.pallas_call(
        _resize_heads_kernel,
        out_shape=jax.ShapeDtypeStruct((Nb, 2, nc, H, W), jnp.float32),
        grid=(Nb,),
        in_specs=[
            pl.BlockSpec((None, nc, Ho, Wo), lambda n: (n, 0, 0, 0)),
            pl.BlockSpec((None, nc, Ho, Wo), lambda n: (n, 0, 0, 0)),
            pl.BlockSpec((H, Ho), lambda n: (0, 0)),
            pl.BlockSpec((Wo, W), lambda n: (0, 0)),
        ],
        out_specs=pl.BlockSpec((None, 2, nc, H, W), lambda n: (n, 0, 0, 0, 0)),
        compiler_params=pltpu.CompilerParams(
            dimension_semantics=("parallel",),
            vmem_limit_bytes=_VMEM_LIMIT,
        ),
        cost_estimate=pl.CostEstimate(
            flops=2 * Nb * 2 * nc * (Ho * Wo * W + Ho * W * H),
            transcendentals=0,
            bytes_accessed=Nb * 2 * nc * Ho * Wo * 2
                           + Nb * (H * Ho + Wo * W) * 2
                           + Nb * 2 * nc * H * W * 4,
        ),
    )(logits_out.astype(jnp.bfloat16), logits_aux.astype(jnp.bfloat16),
      ah.astype(jnp.bfloat16), awt.astype(jnp.bfloat16))


# ------------------------------- JAX glue ----------------------------------

def _im2col(x, kh, kw, stride, padding):
    """x: (N, C, H, W) -> (N, C*kh*kw, Ho*Wo) sample-major patches.

    Tap ordering (c, i, j) matches w.reshape(Cout, Cin*kh*kw)."""
    N, C, H, W = x.shape
    Ho = (H + 2 * padding - kh) // stride + 1
    Wo = (W + 2 * padding - kw) // stride + 1
    xp = jnp.pad(x, ((0, 0), (0, 0), (padding, padding), (padding, padding)))
    taps = []
    for i in range(kh):
        for j in range(kw):
            taps.append(xp[:, :, i:i + stride * Ho:stride,
                           j:j + stride * Wo:stride])
    p = jnp.stack(taps, axis=2)                       # (N, C, kh*kw, Ho, Wo)
    return p.reshape(N, C * kh * kw, Ho * Wo), Ho, Wo


def conv2d(x, w, b, *, stride, padding, relu):
    """3x3 conv in sample-major layout via im2col + batched Pallas matmul.

    x: (N, Cin, H, W); w: (Cout, Cin, kh, kw);  returns (N, Cout, Ho, Wo) bf16.
    """
    Cout, Cin, kh, kw = w.shape
    assert Cin == x.shape[1]
    p, Ho, Wo = _im2col(x, kh, kw, stride, padding)   # (N, Cin*kh*kw, Ho*Wo)
    o = matmul_bias_act(w.reshape(Cout, Cin * kh * kw), p, b, relu=relu)
    return o.reshape(x.shape[0], Cout, Ho, Wo)


def _bilinear_matrix(out_size, in_size):
    """Interpolation matrix for F.interpolate(bilinear, align_corners=False)."""
    scale = in_size / out_size
    d = jnp.arange(out_size, dtype=jnp.float32)
    src = (d + 0.5) * scale - 0.5
    src = jnp.maximum(src, 0.0)                       # PyTorch clamps negatives
    i0 = jnp.clip(jnp.floor(src).astype(jnp.int32), 0, in_size - 1)
    i1 = jnp.minimum(i0 + 1, in_size - 1)
    lam = src - i0.astype(jnp.float32)
    A = (jax.nn.one_hot(i0, in_size, dtype=jnp.float32) * (1.0 - lam)[:, None]
         + jax.nn.one_hot(i1, in_size, dtype=jnp.float32) * lam[:, None])
    return A                                          # (out_size, in_size)


# --------------------- _SimpleSegmentationModel.forward --------------------

def simple_segmentation_forward(x, params):
    N, C, H, W = x.shape
    hidden = params["conv1_w"].shape[0]
    nc = params["cls_w"].shape[0]

    # backbone (synthetic): sample-major layout, no input transpose needed
    aux = conv2d(x, params["conv1_w"], params["conv1_b"],
                 stride=2, padding=1, relu=True)              # (N, hidden, Ha, Wa)
    out = conv2d(aux, params["conv2_w"], params["conv2_b"],
                 stride=1, padding=1, relu=True)              # (N, hidden, Ho, Wo)
    assert out.shape[2:] == aux.shape[2:]
    Ho, Wo = out.shape[2], out.shape[3]
    S = Ho * Wo

    # classifier / aux_classifier: 1x1 conv == channel matmul (same kernel)
    feat_out = out.reshape(N, hidden, S)                      # free reshapes
    feat_aux = aux.reshape(N, hidden, S)
    logits_out = matmul_bias_act(params["cls_w"].reshape(nc, hidden),
                                 feat_out, params["cls_b"], relu=False)
    logits_aux = matmul_bias_act(params["aux_w"].reshape(nc, hidden),
                                 feat_aux, params["aux_b"], relu=False)

    # separable bilinear resize (align_corners=False), both heads fused
    ah = _bilinear_matrix(H, Ho)                              # (H, Ho)
    awt = _bilinear_matrix(W, Wo).T                           # (Wo, W)
    y = bilinear_resize_heads(logits_out.reshape(N, nc, Ho, Wo),
                              logits_aux.reshape(N, nc, Ho, Wo),
                              ah, awt)                        # (N, 2, nc, H, W)
    return {"out": y[:, 0], "aux": y[:, 1]}


# --------------------------------- main -------------------------------------

def _init_params(key, c_in, hidden, num_classes):
    ks = jax.random.split(key, 8)
    scale = 0.1
    return {
        "conv1_w": scale * jax.random.normal(ks[0], (hidden, c_in, 3, 3), jnp.float32),
        "conv1_b": scale * jax.random.normal(ks[1], (hidden,), jnp.float32),
        "conv2_w": scale * jax.random.normal(ks[2], (hidden, hidden, 3, 3), jnp.float32),
        "conv2_b": scale * jax.random.normal(ks[3], (hidden,), jnp.float32),
        "cls_w": scale * jax.random.normal(ks[4], (num_classes, hidden, 1, 1), jnp.float32),
        "cls_b": scale * jax.random.normal(ks[5], (num_classes,), jnp.float32),
        "aux_w": scale * jax.random.normal(ks[6], (num_classes, hidden, 1, 1), jnp.float32),
        "aux_b": scale * jax.random.normal(ks[7], (num_classes,), jnp.float32),
    }


if __name__ == "__main__":
    key = jax.random.PRNGKey(0)
    k_x, k_p = jax.random.split(key)

    B, C_IN, H, W = 2, 4, 16, 16
    HIDDEN, NUM_CLASSES = 32, 8

    x = jax.random.normal(k_x, (B, C_IN, H, W), jnp.float32)   # NCHW like PyTorch
    params = _init_params(k_p, C_IN, HIDDEN, NUM_CLASSES)

    result = jax.jit(simple_segmentation_forward)(x, params)
    jax.block_until_ready(result)

    assert result["out"].shape == (B, NUM_CLASSES, H, W)
    assert result["aux"].shape == (B, NUM_CLASSES, H, W)
    assert result["out"].dtype == jnp.float32
    assert bool(jnp.all(jnp.isfinite(result["out"])))
    assert bool(jnp.all(jnp.isfinite(result["aux"])))
    print("KERNEL_OK")
</pallas_src>

<mosaic_0001>
module attributes {stable_mosaic.version = 11 : i64} {
  func.func @_matmul_bias_act_kernel(%arg0: i32, %arg1: i32, %arg2: i32, %arg3: i32, %arg4: memref<32x36xbf16, #tpu.memory_space<vmem>>, %arg5: memref<1x36x64xbf16, #tpu.memory_space<vmem>>, %arg6: memref<32x1xf32, #tpu.memory_space<vmem>>, %arg7: memref<1x32x64xbf16, #tpu.memory_space<vmem>>, %arg8: memref<32x64xf32, #tpu.memory_space<vmem>>) attributes {dimension_semantics = [#tpu.dimension_semantics<parallel>, #tpu.dimension_semantics<parallel>, #tpu.dimension_semantics<parallel>, #tpu.dimension_semantics<arbitrary>], iteration_bounds = array<i64: 2, 1, 1, 1>, scalar_prefetch = 0 : i64, scratch_operands = 1 : i64, tpu.core_type = #tpu.core_type<tc>, window_params = [{transform_indices = @transform_0, window_bounds = array<i64: 32, 36>}, {transform_indices = @transform_1, window_bounds = array<i64: 1, 36, 64>}, {transform_indices = @transform_2, window_bounds = array<i64: 32, 1>}, {transform_indices = @transform_3, window_bounds = array<i64: 1, 32, 64>}]} {
    %c0_i32 = arith.constant 0 : i32
    %0 = arith.cmpi eq, %arg3, %c0_i32 : i32
    %1 = arith.extui %0 : i1 to i32
    %c0_i32_0 = arith.constant 0 : i32
    %2 = arith.cmpi ne, %1, %c0_i32_0 : i32
    scf.if %2 {
      %c0_11 = arith.constant 0 : index
      %c0_12 = arith.constant 0 : index
      %13 = vector.load %arg6[%c0_11, %c0_12] : memref<32x1xf32, #tpu.memory_space<vmem>>, vector<32x1xf32>
      %14 = vector.shape_cast %13 : vector<32x1xf32> to vector<32x1xf32>
      %15 = vector.broadcast %14 : vector<32x1xf32> to vector<32x64xf32>
      %c0_13 = arith.constant 0 : index
      %c0_14 = arith.constant 0 : index
      %16 = vector.load %arg8[%c0_13, %c0_14] : memref<32x64xf32, #tpu.memory_space<vmem>>, vector<32x64xf32>
      tpu.vector_store %arg8[%c0_13, %c0_14], %15 {strides = array<i32>} : memref<32x64xf32, #tpu.memory_space<vmem>>, vector<32x64xf32>,
    } else {
    }
    %c0 = arith.constant 0 : index
    %c0_1 = arith.constant 0 : index
    %3 = vector.load %arg8[%c0, %c0_1] : memref<32x64xf32, #tpu.memory_space<vmem>>, vector<32x64xf32>
    %c0_2 = arith.constant 0 : index
    %c0_3 = arith.constant 0 : index
    %4 = vector.load %arg4[%c0_2, %c0_3] : memref<32x36xbf16, #tpu.memory_space<vmem>>, vector<32x36xbf16>
    %c0_4 = arith.constant 0 : index
    %c0_5 = arith.constant 0 : index
    %c0_6 = arith.constant 0 : index
    %5 = vector.load %arg5[%c0_4, %c0_5, %c0_6] : memref<1x36x64xbf16, #tpu.memory_space<vmem>>, vector<1x36x64xbf16>
    %6 = vector.shape_cast %5 : vector<1x36x64xbf16> to vector<36x64xbf16>
    %cst = arith.constant dense<0.000000e+00> : vector<32x64xf32>
    %7 = tpu.matmul %4, %6, %cst {dimension_numbers = #tpu.dot_dimension_numbers<[1], [0], [0], [1], [0, 0, 1, 1], [], []>} : vector<32x36xbf16>, vector<36x64xbf16>, vector<32x64xf32> -> vector<32x64xf32>
    %8 = arith.addf %3, %7 : vector<32x64xf32>
    %c0_7 = arith.constant 0 : index
    %c0_8 = arith.constant 0 : index
    %9 = vector.load %arg8[%c0_7, %c0_8] : memref<32x64xf32, #tpu.memory_space<vmem>>, vector<32x64xf32>
    tpu.vector_store %arg8[%c0_7, %c0_8], %8 {strides = array<i32>} : memref<32x64xf32, #tpu.memory_space<vmem>>, vector<32x64xf32>,
    %c0_i32_9 = arith.constant 0 : i32
    %10 = arith.cmpi eq, %arg3, %c0_i32_9 : i32
    %11 = arith.extui %10 : i1 to i32
    %c0_i32_10 = arith.constant 0 : i32
    %12 = arith.cmpi ne, %11, %c0_i32_10 : i32
    scf.if %12 {
      %c0_11 = arith.constant 0 : index
      %c0_12 = arith.constant 0 : index
      %13 = vector.load %arg8[%c0_11, %c0_12] : memref<32x64xf32, #tpu.memory_space<vmem>>, vector<32x64xf32>
      %cst_13 = arith.constant 0.000000e+00 : f32
      %14 = vector.broadcast %cst_13 : f32 to vector<32x64xf32>
      %15 = arith.maximumf %13, %14 : vector<32x64xf32>
      %16 = arith.truncf %15 : vector<32x64xf32> to vector<32x64xbf16>
      %c0_14 = arith.constant 0 : index
      %c0_15 = arith.constant 0 : index
      %c0_16 = arith.constant 0 : index
      %17 = vector.load %arg7[%c0_14, %c0_15, %c0_16] : memref<1x32x64xbf16, #tpu.memory_space<vmem>>, vector<1x32x64xbf16>
      %18 = vector.shape_cast %17 : vector<1x32x64xbf16> to vector<32x64xbf16>
      %19 = vector.shape_cast %16 : vector<32x64xbf16> to vector<1x32x64xbf16>
      tpu.vector_store %arg7[%c0_14, %c0_15, %c0_16], %19 {strides = array<i32>} : memref<1x32x64xbf16, #tpu.memory_space<vmem>>, vector<1x32x64xbf16>,
    } else {
    }
    return
  }
  func.func @transform_0(%arg0: i32, %arg1: i32, %arg2: i32, %arg3: i32) -> (i32, i32) {
    %c0_i32 = arith.constant 0 : i32
    return %arg1, %arg3 : i32, i32
  }
  func.func @transform_1(%arg0: i32, %arg1: i32, %arg2: i32, %arg3: i32) -> (i32, i32, i32) {
    %c0_i32 = arith.constant 0 : i32
    return %arg0, %arg3, %arg2 : i32, i32, i32
  }
  func.func @transform_2(%arg0: i32, %arg1: i32, %arg2: i32, %arg3: i32) -> (i32, i32) {
    %c0_i32 = arith.constant 0 : i32
    %c0_i32_0 = arith.constant 0 : i32
    return %arg1, %c0_i32 : i32, i32
  }
  func.func @transform_3(%arg0: i32, %arg1: i32, %arg2: i32, %arg3: i32) -> (i32, i32, i32) {
    %c0_i32 = arith.constant 0 : i32
    return %arg0, %arg1, %arg2 : i32, i32, i32
  }
}

module attributes {stable_mosaic.version = 11 : i64} {
  func.func @_matmul_bias_act_kernel(%arg0: i32, %arg1: i32, %arg2: i32, %arg3: i32, %arg4: memref<32x288xbf16, #tpu.memory_space<vmem>>, %arg5: memref<1x288x64xbf16, #tpu.memory_space<vmem>>, %arg6: memref<32x1xf32, #tpu.memory_space<vmem>>, %arg7: memref<1x32x64xbf16, #tpu.memory_space<vmem>>, %arg8: memref<32x64xf32, #tpu.memory_space<vmem>>) attributes {dimension_semantics = [#tpu.dimension_semantics<parallel>, #tpu.dimension_semantics<parallel>, #tpu.dimension_semantics<parallel>, #tpu.dimension_semantics<arbitrary>], iteration_bounds = array<i64: 2, 1, 1, 1>, scalar_prefetch = 0 : i64, scratch_operands = 1 : i64, tpu.core_type = #tpu.core_type<tc>, window_params = [{transform_indices = @transform_0, window_bounds = array<i64: 32, 288>}, {transform_indices = @transform_1, window_bounds = array<i64: 1, 288, 64>}, {transform_indices = @transform_2, window_bounds = array<i64: 32, 1>}, {transform_indices = @transform_3, window_bounds = array<i64: 1, 32, 64>}]} {
    %c0_i32 = arith.constant 0 : i32
    %0 = arith.cmpi eq, %arg3, %c0_i32 : i32
    %1 = arith.extui %0 : i1 to i32
    %c0_i32_0 = arith.constant 0 : i32
    %2 = arith.cmpi ne, %1, %c0_i32_0 : i32
    scf.if %2 {
      %c0_11 = arith.constant 0 : index
      %c0_12 = arith.constant 0 : index
      %13 = vector.load %arg6[%c0_11, %c0_12] : memref<32x1xf32, #tpu.memory_space<vmem>>, vector<32x1xf32>
      %14 = vector.shape_cast %13 : vector<32x1xf32> to vector<32x1xf32>
      %15 = vector.broadcast %14 : vector<32x1xf32> to vector<32x64xf32>
      %c0_13 = arith.constant 0 : index
      %c0_14 = arith.constant 0 : index
      %16 = vector.load %arg8[%c0_13, %c0_14] : memref<32x64xf32, #tpu.memory_space<vmem>>, vector<32x64xf32>
      tpu.vector_store %arg8[%c0_13, %c0_14], %15 {strides = array<i32>} : memref<32x64xf32, #tpu.memory_space<vmem>>, vector<32x64xf32>,
    } else {
    }
    %c0 = arith.constant 0 : index
    %c0_1 = arith.constant 0 : index
    %3 = vector.load %arg8[%c0, %c0_1] : memref<32x64xf32, #tpu.memory_space<vmem>>, vector<32x64xf32>
    %c0_2 = arith.constant 0 : index
    %c0_3 = arith.constant 0 : index
    %4 = vector.load %arg4[%c0_2, %c0_3] : memref<32x288xbf16, #tpu.memory_space<vmem>>, vector<32x288xbf16>
    %c0_4 = arith.constant 0 : index
    %c0_5 = arith.constant 0 : index
    %c0_6 = arith.constant 0 : index
    %5 = vector.load %arg5[%c0_4, %c0_5, %c0_6] : memref<1x288x64xbf16, #tpu.memory_space<vmem>>, vector<1x288x64xbf16>
    %6 = vector.shape_cast %5 : vector<1x288x64xbf16> to vector<288x64xbf16>
    %cst = arith.constant dense<0.000000e+00> : vector<32x64xf32>
    %7 = tpu.matmul %4, %6, %cst {dimension_numbers = #tpu.dot_dimension_numbers<[1], [0], [0], [1], [0, 0, 1, 1], [], []>} : vector<32x288xbf16>, vector<288x64xbf16>, vector<32x64xf32> -> vector<32x64xf32>
    %8 = arith.addf %3, %7 : vector<32x64xf32>
    %c0_7 = arith.constant 0 : index
    %c0_8 = arith.constant 0 : index
    %9 = vector.load %arg8[%c0_7, %c0_8] : memref<32x64xf32, #tpu.memory_space<vmem>>, vector<32x64xf32>
    tpu.vector_store %arg8[%c0_7, %c0_8], %8 {strides = array<i32>} : memref<32x64xf32, #tpu.memory_space<vmem>>, vector<32x64xf32>,
    %c0_i32_9 = arith.constant 0 : i32
    %10 = arith.cmpi eq, %arg3, %c0_i32_9 : i32
    %11 = arith.extui %10 : i1 to i32
    %c0_i32_10 = arith.constant 0 : i32
    %12 = arith.cmpi ne, %11, %c0_i32_10 : i32
    scf.if %12 {
      %c0_11 = arith.constant 0 : index
      %c0_12 = arith.constant 0 : index
      %13 = vector.load %arg8[%c0_11, %c0_12] : memref<32x64xf32, #tpu.memory_space<vmem>>, vector<32x64xf32>
      %cst_13 = arith.constant 0.000000e+00 : f32
      %14 = vector.broadcast %cst_13 : f32 to vector<32x64xf32>
      %15 = arith.maximumf %13, %14 : vector<32x64xf32>
      %16 = arith.truncf %15 : vector<32x64xf32> to vector<32x64xbf16>
      %c0_14 = arith.constant 0 : index
      %c0_15 = arith.constant 0 : index
      %c0_16 = arith.constant 0 : index
      %17 = vector.load %arg7[%c0_14, %c0_15, %c0_16] : memref<1x32x64xbf16, #tpu.memory_space<vmem>>, vector<1x32x64xbf16>
      %18 = vector.shape_cast %17 : vector<1x32x64xbf16> to vector<32x64xbf16>
      %19 = vector.shape_cast %16 : vector<32x64xbf16> to vector<1x32x64xbf16>
      tpu.vector_store %arg7[%c0_14, %c0_15, %c0_16], %19 {strides = array<i32>} : memref<1x32x64xbf16, #tpu.memory_space<vmem>>, vector<1x32x64xbf16>,
    } else {
    }
    return
  }
  func.func @transform_0(%arg0: i32, %arg1: i32, %arg2: i32, %arg3: i32) -> (i32, i32) {
    %c0_i32 = arith.constant 0 : i32
    return %arg1, %arg3 : i32, i32
  }
  func.func @transform_1(%arg0: i32, %arg1: i32, %arg2: i32, %arg3: i32) -> (i32, i32, i32) {
    %c0_i32 = arith.constant 0 : i32
    return %arg0, %arg3, %arg2 : i32, i32, i32
  }
  func.func @transform_2(%arg0: i32, %arg1: i32, %arg2: i32, %arg3: i32) -> (i32, i32) {
    %c0_i32 = arith.constant 0 : i32
    %c0_i32_0 = arith.constant 0 : i32
    return %arg1, %c0_i32 : i32, i32
  }
  func.func @transform_3(%arg0: i32, %arg1: i32, %arg2: i32, %arg3: i32) -> (i32, i32, i32) {
    %c0_i32 = arith.constant 0 : i32
    return %arg0, %arg1, %arg2 : i32, i32, i32
  }
}

module attributes {stable_mosaic.version = 11 : i64} {
  func.func @_matmul_bias_act_kernel(%arg0: i32, %arg1: i32, %arg2: i32, %arg3: i32, %arg4: memref<8x32xbf16, #tpu.memory_space<vmem>>, %arg5: memref<1x32x64xbf16, #tpu.memory_space<vmem>>, %arg6: memref<8x1xf32, #tpu.memory_space<vmem>>, %arg7: memref<1x8x64xbf16, #tpu.memory_space<vmem>>, %arg8: memref<8x64xf32, #tpu.memory_space<vmem>>) attributes {dimension_semantics = [#tpu.dimension_semantics<parallel>, #tpu.dimension_semantics<parallel>, #tpu.dimension_semantics<parallel>, #tpu.dimension_semantics<arbitrary>], iteration_bounds = array<i64: 2, 1, 1, 1>, scalar_prefetch = 0 : i64, scratch_operands = 1 : i64, tpu.core_type = #tpu.core_type<tc>, window_params = [{transform_indices = @transform_0, window_bounds = array<i64: 8, 32>}, {transform_indices = @transform_1, window_bounds = array<i64: 1, 32, 64>}, {transform_indices = @transform_2, window_bounds = array<i64: 8, 1>}, {transform_indices = @transform_3, window_bounds = array<i64: 1, 8, 64>}]} {
    %c0_i32 = arith.constant 0 : i32
    %0 = arith.cmpi eq, %arg3, %c0_i32 : i32
    %1 = arith.extui %0 : i1 to i32
    %c0_i32_0 = arith.constant 0 : i32
    %2 = arith.cmpi ne, %1, %c0_i32_0 : i32
    scf.if %2 {
      %c0_11 = arith.constant 0 : index
      %c0_12 = arith.constant 0 : index
      %13 = vector.load %arg6[%c0_11, %c0_12] : memref<8x1xf32, #tpu.memory_space<vmem>>, vector<8x1xf32>
      %14 = vector.shape_cast %13 : vector<8x1xf32> to vector<8x1xf32>
      %15 = vector.broadcast %14 : vector<8x1xf32> to vector<8x64xf32>
      %c0_13 = arith.constant 0 : index
      %c0_14 = arith.constant 0 : index
      %16 = vector.load %arg8[%c0_13, %c0_14] : memref<8x64xf32, #tpu.memory_space<vmem>>, vector<8x64xf32>
      tpu.vector_store %arg8[%c0_13, %c0_14], %15 {strides = array<i32>} : memref<8x64xf32, #tpu.memory_space<vmem>>, vector<8x64xf32>,
    } else {
    }
    %c0 = arith.constant 0 : index
    %c0_1 = arith.constant 0 : index
    %3 = vector.load %arg8[%c0, %c0_1] : memref<8x64xf32, #tpu.memory_space<vmem>>, vector<8x64xf32>
    %c0_2 = arith.constant 0 : index
    %c0_3 = arith.constant 0 : index
    %4 = vector.load %arg4[%c0_2, %c0_3] : memref<8x32xbf16, #tpu.memory_space<vmem>>, vector<8x32xbf16>
    %c0_4 = arith.constant 0 : index
    %c0_5 = arith.constant 0 : index
    %c0_6 = arith.constant 0 : index
    %5 = vector.load %arg5[%c0_4, %c0_5, %c0_6] : memref<1x32x64xbf16, #tpu.memory_space<vmem>>, vector<1x32x64xbf16>
    %6 = vector.shape_cast %5 : vector<1x32x64xbf16> to vector<32x64xbf16>
    %cst = arith.constant dense<0.000000e+00> : vector<8x64xf32>
    %7 = tpu.matmul %4, %6, %cst {dimension_numbers = #tpu.dot_dimension_numbers<[1], [0], [0], [1], [0, 0, 1, 1], [], []>} : vector<8x32xbf16>, vector<32x64xbf16>, vector<8x64xf32> -> vector<8x64xf32>
    %8 = arith.addf %3, %7 : vector<8x64xf32>
    %c0_7 = arith.constant 0 : index
    %c0_8 = arith.constant 0 : index
    %9 = vector.load %arg8[%c0_7, %c0_8] : memref<8x64xf32, #tpu.memory_space<vmem>>, vector<8x64xf32>
    tpu.vector_store %arg8[%c0_7, %c0_8], %8 {strides = array<i32>} : memref<8x64xf32, #tpu.memory_space<vmem>>, vector<8x64xf32>,
    %c0_i32_9 = arith.constant 0 : i32
    %10 = arith.cmpi eq, %arg3, %c0_i32_9 : i32
    %11 = arith.extui %10 : i1 to i32
    %c0_i32_10 = arith.constant 0 : i32
    %12 = arith.cmpi ne, %11, %c0_i32_10 : i32
    scf.if %12 {
      %c0_11 = arith.constant 0 : index
      %c0_12 = arith.constant 0 : index
      %13 = vector.load %arg8[%c0_11, %c0_12] : memref<8x64xf32, #tpu.memory_space<vmem>>, vector<8x64xf32>
      %14 = arith.truncf %13 : vector<8x64xf32> to vector<8x64xbf16>
      %c0_13 = arith.constant 0 : index
      %c0_14 = arith.constant 0 : index
      %c0_15 = arith.constant 0 : index
      %15 = vector.load %arg7[%c0_13, %c0_14, %c0_15] : memref<1x8x64xbf16, #tpu.memory_space<vmem>>, vector<1x8x64xbf16>
      %16 = vector.shape_cast %15 : vector<1x8x64xbf16> to vector<8x64xbf16>
      %17 = vector.shape_cast %14 : vector<8x64xbf16> to vector<1x8x64xbf16>
      tpu.vector_store %arg7[%c0_13, %c0_14, %c0_15], %17 {strides = array<i32>} : memref<1x8x64xbf16, #tpu.memory_space<vmem>>, vector<1x8x64xbf16>,
    } else {
    }
    return
  }
  func.func @transform_0(%arg0: i32, %arg1: i32, %arg2: i32, %arg3: i32) -> (i32, i32) {
    %c0_i32 = arith.constant 0 : i32
    return %arg1, %arg3 : i32, i32
  }
  func.func @transform_1(%arg0: i32, %arg1: i32, %arg2: i32, %arg3: i32) -> (i32, i32, i32) {
    %c0_i32 = arith.constant 0 : i32
    return %arg0, %arg3, %arg2 : i32, i32, i32
  }
  func.func @transform_2(%arg0: i32, %arg1: i32, %arg2: i32, %arg3: i32) -> (i32, i32) {
    %c0_i32 = arith.constant 0 : i32
    %c0_i32_0 = arith.constant 0 : i32
    return %arg1, %c0_i32 : i32, i32
  }
  func.func @transform_3(%arg0: i32, %arg1: i32, %arg2: i32, %arg3: i32) -> (i32, i32, i32) {
    %c0_i32 = arith.constant 0 : i32
    return %arg0, %arg1, %arg2 : i32, i32, i32
  }
}

module attributes {stable_mosaic.version = 11 : i64} {
  func.func @_resize_heads_kernel(%arg0: i32, %arg1: memref<1x8x8x8xbf16, #tpu.memory_space<vmem>>, %arg2: memref<1x8x8x8xbf16, #tpu.memory_space<vmem>>, %arg3: memref<16x8xbf16, #tpu.memory_space<vmem>>, %arg4: memref<8x16xbf16, #tpu.memory_space<vmem>>, %arg5: memref<1x2x8x16x16xf32, #tpu.memory_space<vmem>>) attributes {dimension_semantics = [#tpu.dimension_semantics<parallel>], iteration_bounds = array<i64: 2>, scalar_prefetch = 0 : i64, scratch_operands = 0 : i64, tpu.core_type = #tpu.core_type<tc>, window_params = [{transform_indices = @transform_0, window_bounds = array<i64: 1, 8, 8, 8>}, {transform_indices = @transform_1, window_bounds = array<i64: 1, 8, 8, 8>}, {pipeline_mode = #tpu.pipeline_mode<synchronous>, transform_indices = @transform_2, window_bounds = array<i64: 16, 8>}, {pipeline_mode = #tpu.pipeline_mode<synchronous>, transform_indices = @transform_3, window_bounds = array<i64: 8, 16>}, {transform_indices = @transform_4, window_bounds = array<i64: 1, 2, 8, 16, 16>}]} {
    %c0 = arith.constant 0 : index
    %c0_0 = arith.constant 0 : index
    %0 = vector.load %arg4[%c0, %c0_0] : memref<8x16xbf16, #tpu.memory_space<vmem>>, vector<8x16xbf16>
    %1 = vector.shape_cast %0 : vector<8x16xbf16> to vector<1x8x16xbf16>
    %2 = vector.broadcast %1 : vector<1x8x16xbf16> to vector<8x8x16xbf16>
    %c0_1 = arith.constant 0 : index
    %c0_2 = arith.constant 0 : index
    %3 = vector.load %arg3[%c0_1, %c0_2] : memref<16x8xbf16, #tpu.memory_space<vmem>>, vector<16x8xbf16>
    %4 = vector.shape_cast %3 : vector<16x8xbf16> to vector<1x16x8xbf16>
    %5 = vector.broadcast %4 : vector<1x16x8xbf16> to vector<8x16x8xbf16>
    %c0_3 = arith.constant 0 : index
    %c0_4 = arith.constant 0 : index
    %c0_5 = arith.constant 0 : index
    %c0_6 = arith.constant 0 : index
    %6 = vector.load %arg1[%c0_3, %c0_4, %c0_5, %c0_6] : memref<1x8x8x8xbf16, #tpu.memory_space<vmem>>, vector<1x8x8x8xbf16>
    %7 = vector.shape_cast %6 : vector<1x8x8x8xbf16> to vector<8x8x8xbf16>
    %cst = arith.constant dense<0.000000e+00> : vector<8x8x16xf32>
    %8 = tpu.matmul %7, %2, %cst {dimension_numbers = #tpu.dot_dimension_numbers<[2], [1], [1], [2], [0, 0, 0, 1, 1, 2], [0], [0]>} : vector<8x8x8xbf16>, vector<8x8x16xbf16>, vector<8x8x16xf32> -> vector<8x8x16xf32>
    %9 = arith.truncf %8 : vector<8x8x16xf32> to vector<8x8x16xbf16>
    %cst_7 = arith.constant dense<0.000000e+00> : vector<8x16x16xf32>
    %10 = tpu.matmul %5, %9, %cst_7 {dimension_numbers = #tpu.dot_dimension_numbers<[2], [1], [1], [2], [0, 0, 0, 1, 1, 2], [0], [0]>} : vector<8x16x8xbf16>, vector<8x8x16xbf16>, vector<8x16x16xf32> -> vector<8x16x16xf32>
    %c0_8 = arith.constant 0 : index
    %c0_9 = arith.constant 0 : index
    %c0_10 = arith.constant 0 : index
    %c0_11 = arith.constant 0 : index
    %c0_12 = arith.constant 0 : index
    %11 = vector.load %arg5[%c0_8, %c0_9, %c0_10, %c0_11, %c0_12] : memref<1x2x8x16x16xf32, #tpu.memory_space<vmem>>, vector<1x1x8x16x16xf32>
    %12 = vector.shape_cast %11 : vector<1x1x8x16x16xf32> to vector<8x16x16xf32>
    %13 = vector.shape_cast %10 : vector<8x16x16xf32> to vector<1x1x8x16x16xf32>
    tpu.vector_store %arg5[%c0_8, %c0_9, %c0_10, %c0_11, %c0_12], %13 {strides = array<i32>} : memref<1x2x8x16x16xf32, #tpu.memory_space<vmem>>, vector<1x1x8x16x16xf32>,
    %c0_13 = arith.constant 0 : index
    %c0_14 = arith.constant 0 : index
    %c0_15 = arith.constant 0 : index
    %c0_16 = arith.constant 0 : index
    %14 = vector.load %arg2[%c0_13, %c0_14, %c0_15, %c0_16] : memref<1x8x8x8xbf16, #tpu.memory_space<vmem>>, vector<1x8x8x8xbf16>
    %15 = vector.shape_cast %14 : vector<1x8x8x8xbf16> to vector<8x8x8xbf16>
    %cst_17 = arith.constant dense<0.000000e+00> : vector<8x8x16xf32>
    %16 = tpu.matmul %15, %2, %cst_17 {dimension_numbers = #tpu.dot_dimension_numbers<[2], [1], [1], [2], [0, 0, 0, 1, 1, 2], [0], [0]>} : vector<8x8x8xbf16>, vector<8x8x16xbf16>, vector<8x8x16xf32> -> vector<8x8x16xf32>
    %17 = arith.truncf %16 : vector<8x8x16xf32> to vector<8x8x16xbf16>
    %cst_18 = arith.constant dense<0.000000e+00> : vector<8x16x16xf32>
    %18 = tpu.matmul %5, %17, %cst_18 {dimension_numbers = #tpu.dot_dimension_numbers<[2], [1], [1], [2], [0, 0, 0, 1, 1, 2], [0], [0]>} : vector<8x16x8xbf16>, vector<8x8x16xbf16>, vector<8x16x16xf32> -> vector<8x16x16xf32>
    %c0_19 = arith.constant 0 : index
    %c1 = arith.constant 1 : index
    %c0_20 = arith.constant 0 : index
    %c0_21 = arith.constant 0 : index
    %c0_22 = arith.constant 0 : index
    %19 = vector.load %arg5[%c0_19, %c1, %c0_20, %c0_21, %c0_22] : memref<1x2x8x16x16xf32, #tpu.memory_space<vmem>>, vector<1x1x8x16x16xf32>
    %20 = vector.shape_cast %19 : vector<1x1x8x16x16xf32> to vector<8x16x16xf32>
    %21 = vector.shape_cast %18 : vector<8x16x16xf32> to vector<1x1x8x16x16xf32>
    tpu.vector_store %arg5[%c0_19, %c1, %c0_20, %c0_21, %c0_22], %21 {strides = array<i32>} : memref<1x2x8x16x16xf32, #tpu.memory_space<vmem>>, vector<1x1x8x16x16xf32>,
    return
  }
  func.func @transform_0(%arg0: i32) -> (i32, i32, i32, i32) {
    %c0_i32 = arith.constant 0 : i32
    %c0_i32_0 = arith.constant 0 : i32
    %c0_i32_1 = arith.constant 0 : i32
    %c0_i32_2 = arith.constant 0 : i32
    return %arg0, %c0_i32, %c0_i32_0, %c0_i32_1 : i32, i32, i32, i32
  }
  func.func @transform_1(%arg0: i32) -> (i32, i32, i32, i32) {
    %c0_i32 = arith.constant 0 : i32
    %c0_i32_0 = arith.constant 0 : i32
    %c0_i32_1 = arith.constant 0 : i32
    %c0_i32_2 = arith.constant 0 : i32
    return %arg0, %c0_i32, %c0_i32_0, %c0_i32_1 : i32, i32, i32, i32
  }
  func.func @transform_2(%arg0: i32) -> (i32, i32) {
    %c0_i32 = arith.constant 0 : i32
    %c0_i32_0 = arith.constant 0 : i32
    %c0_i32_1 = arith.constant 0 : i32
    return %c0_i32, %c0_i32_0 : i32, i32
  }
  func.func @transform_3(%arg0: i32) -> (i32, i32) {
    %c0_i32 = arith.constant 0 : i32
    %c0_i32_0 = arith.constant 0 : i32
    %c0_i32_1 = arith.constant 0 : i32
    return %c0_i32, %c0_i32_0 : i32, i32
  }
  func.func @transform_4(%arg0: i32) -> (i32, i32, i32, i32, i32) {
    %c0_i32 = arith.constant 0 : i32
    %c0_i32_0 = arith.constant 0 : i32
    %c0_i32_1 = arith.constant 0 : i32
    %c0_i32_2 = arith.constant 0 : i32
    %c0_i32_3 = arith.constant 0 : i32
    return %arg0, %c0_i32, %c0_i32_0, %c0_i32_1, %c0_i32_2 : i32, i32, i32, i32, i32
  }
}

</mosaic_0001>

<llo_original>
// kernel: simple_segmentation_forward.5
$region0: #{simple_segmentation_forward.5}
  #allocation0 [shape = 'u32[]', space=smem, size = 0x4, offset = 0x4, fixed_abs, tag = 'smem constant byte address 0x4 - core index']
  #allocation1 [shape = 'u32[72,128]{1,0:T(1,128)}', space=vmem, size = 0x9000, scoped, tag = 'internal scratch']
  #allocation2 [shape = 'f32[32,64]{1,0:T(8,128)}', space=vmem, size = 0x4000, scoped, tag = 'scratch operand']
  %s0 = inlined_call_operand.vmem [shape: bf16[32,36], index: 0, kind: input, shape index: {}]
  %s1 = inlined_call_operand.vmem [shape: bf16[2,36,64], index: 1, kind: input, shape index: {}]
  %s2 = inlined_call_operand.vmem [shape: f32[32,1], index: 2, kind: input, shape index: {}]
  %s3 = inlined_call_operand.vmem [shape: bf16[2,32,64], index: 3, kind: output, shape index: {}]
  %s4 = sld [smem:[#allocation0]]
  $region53: #{simple_segmentation_forward.5} parent=0
    _
  %s6 = ssub.s32 1, %s4
  %s7 = scalar_select 0, %s6, %s4
  loop: start=0, step=1, limit=4
  $region2: #{simple_segmentation_forward.5} parent=0 // loop_pre_header
    _
  $region3: #{simple_segmentation_forward.5} parent=0 // loop_header
    %s9 = sphi 0, %s13
    %p10 = scmp.ge.s32.totalorder %s9, 4
    %s16 = sphi 0, %s42
    %s17 = sphi 0, %s38
    %s18 = sphi 0, %s34
    %s19 = sphi 0, %s30
    %s20 = sphi 0, %s16
    %s21 = sphi 0, %s17
    %s22 = sphi 0, %s18
    %s23 = sphi 0, %s19
    %s24 = sphi 0, %s20
    %s25 = sphi 0, %s21
    %s26 = sphi 0, %s22
    %s27 = sphi 0, %s23
    %s47 = sphi 0, %s49
    %s50 = sphi 0, %s47
    %s51 = sphi 0, %s50
    %s67 = sphi 0, %s51
    %s77 = sphi 0, %s79
    %s80 = sphi 0, %s77
    %s81 = sphi 0, %s80
    %s97 = sphi 0, %s81
    %s103 = sphi 0, %s105
    %s106 = sphi 0, %s103
    %s107 = sphi 0, %s106
    %s123 = sphi 0, %s107
    %s133 = sphi 0, %s135
    %s136 = sphi 0, %s133
    %s137 = sphi 0, %s136
    %s153 = sphi 0, %s137
  $region4: #{simple_segmentation_forward.5} parent=0 // loop_header_branch
    %12 = sbr.rel (%p10) target = $region8
  $region5: #{simple_segmentation_forward.5} parent=0 // loop_body
    %s14 = ssub.s32 %s9, 1
    %s15 = ssub.s32 %s9, 2
    %s28 = sadd.s32 1, %s19
    %p29 = scmp.ge.s32.totalorder %s28, 1
    %s30 = scalar_select %p29, 0, %s28
    %s31 = sadd.s32 1, %s18
    %s32 = scalar_select %p29, %s31, %s18
    %p33 = scmp.ge.s32.totalorder %s32, 1
    %s34 = scalar_select %p33, 0, %s32
    %s35 = sadd.s32 1, %s17
    %s36 = scalar_select %p33, %s35, %s17
    %p37 = scmp.ge.s32.totalorder %s36, 1
    %s38 = scalar_select %p37, 0, %s36
    %s39 = sadd.s32 1, %s16
    %s40 = scalar_select %p37, %s39, %s16
    %p41 = scmp.ge.s32.totalorder %s40, 2
    %s42 = scalar_select %p41, 0, %s40
    %s43 = ssub.s32 %s17, %s38
    %s44 = ssub.s32 %s19, %s30
    %s45 = sor.u32 %s43, %s44
    %p46 = scmp.eq.s32.totalorder %s45, 0
    %s48 = sadd.s32 %s47, 1
    %s49 = scalar_select %p46, %s47, %s48
    %p52 = pneg %p46
    %p53 = scmp.eq.s32.totalorder %s9, 1
    %p54 = por %p52, %p53
    %p55 = scmp.ne.s32.totalorder %s47, %s50
    %p56 = scmp.eq.s32.totalorder %s9, 0
    %p57 = por %p55, %p56
    %p58 = scmp.ne.s32.totalorder %s47, %s50
    %p59 = scmp.eq.s32.totalorder %s14, 1
    %p60 = por %p58, %p59
    %p61 = scmp.ne.s32.totalorder %s50, %s51
    %p62 = scmp.eq.s32.totalorder %s14, 0
    %p63 = por %p61, %p62
    %p64 = scmp.ne.s32.totalorder %s50, %s51
    %p65 = scmp.eq.s32.totalorder %s15, 1
    %p66 = por %p64, %p65
    %p68 = scmp.ne.s32.totalorder %s51, %s67
    %p69 = scmp.eq.s32.totalorder %s15, 0
    %p70 = por %p68, %p69
    %s71 = ssub.s32 %s16, %s42
    %s72 = ssub.s32 %s19, %s30
    %s73 = sor.u32 %s71, %s72
    %s74 = ssub.s32 %s18, %s34
    %s75 = sor.u32 %s73, %s74
    %p76 = scmp.eq.s32.totalorder %s75, 0
    %s78 = sadd.s32 %s77, 1
    %s79 = scalar_select %p76, %s77, %s78
    %p82 = pneg %p76
    %p83 = scmp.eq.s32.totalorder %s9, 1
    %p84 = por %p82, %p83
    %p85 = scmp.ne.s32.totalorder %s77, %s80
    %p86 = scmp.eq.s32.totalorder %s9, 0
    %p87 = por %p85, %p86
    %p88 = scmp.ne.s32.totalorder %s77, %s80
    %p89 = scmp.eq.s32.totalorder %s14, 1
    %p90 = por %p88, %p89
    %p91 = scmp.ne.s32.totalorder %s80, %s81
    %p92 = scmp.eq.s32.totalorder %s14, 0
    %p93 = por %p91, %p92
    %p94 = scmp.ne.s32.totalorder %s80, %s81
    %p95 = scmp.eq.s32.totalorder %s15, 1
    %p96 = por %p94, %p95
    %p98 = scmp.ne.s32.totalorder %s81, %s97
    %p99 = scmp.eq.s32.totalorder %s15, 0
    %p100 = por %p98, %p99
    %s101 = ssub.s32 %s17, %s38
    %p102 = scmp.eq.s32.totalorder %s101, 0
    %s104 = sadd.s32 %s103, 1
    %s105 = scalar_select %p102, %s103, %s104
    %p108 = pneg %p102
    %p109 = scmp.eq.s32.totalorder %s9, 1
    %p110 = por %p108, %p109
    %p111 = scmp.ne.s32.totalorder %s103, %s106
    %p112 = scmp.eq.s32.totalorder %s9, 0
    %p113 = por %p111, %p112
    %p114 = scmp.ne.s32.totalorder %s103, %s106
    %p115 = scmp.eq.s32.totalorder %s14, 1
    %p116 = por %p114, %p115
    %p117 = scmp.ne.s32.totalorder %s106, %s107
    %p118 = scmp.eq.s32.totalorder %s14, 0
    %p119 = por %p117, %p118
    %p120 = scmp.ne.s32.totalorder %s106, %s107
    %p121 = scmp.eq.s32.totalorder %s15, 1
    %p122 = por %p120, %p121
    %p124 = scmp.ne.s32.totalorder %s107, %s123
    %p125 = scmp.eq.s32.totalorder %s15, 0
    %p126 = por %p124, %p125
    %s127 = ssub.s32 %s16, %s42
    %s128 = ssub.s32 %s17, %s38
    %s129 = sor.u32 %s127, %s128
    %s130 = ssub.s32 %s18, %s34
    %s131 = sor.u32 %s129, %s130
    %p132 = scmp.eq.s32.totalorder %s131, 0
    %s134 = sadd.s32 %s133, 1
    %s135 = scalar_select %p132, %s133, %s134
    %p138 = pneg %p132
    %p139 = scmp.eq.s32.totalorder %s9, 1
    %p140 = por %p138, %p139
    %p141 = scmp.ne.s32.totalorder %s133, %s136
    %p142 = scmp.eq.s32.totalorder %s9, 0
    %p143 = por %p141, %p142
    %p144 = scmp.ne.s32.totalorder %s133, %s136
    %p145 = scmp.eq.s32.totalorder %s14, 1
    %p146 = por %p144, %p145
    %p147 = scmp.ne.s32.totalorder %s136, %s137
    %p148 = scmp.eq.s32.totalorder %s14, 0
    %p149 = por %p147, %p148
    %p150 = scmp.ne.s32.totalorder %s136, %s137
    %p151 = scmp.eq.s32.totalorder %s15, 1
    %p152 = por %p150, %p151
    %p154 = scmp.ne.s32.totalorder %s137, %s153
    %p155 = scmp.eq.s32.totalorder %s15, 0
    %p156 = por %p154, %p155
    %p157 = scmp.le.s32.totalorder 1, %s9
    %p158 = scmp.lt.s32.totalorder %s9, 3
    %p159 = pnand %p157, %p158
    %p160 = pneg %p159
    // Predicated region
    $region9: #{simple_segmentation_forward.5} parent=5 // pred_check
      _
    $region10: #{simple_segmentation_forward.5} parent=5 // pred_check_branch
      %162 = sbr.rel (%p159) target = $region12
    $region11: #{simple_segmentation_forward.5} parent=5 // pred_region
      %s163 = ssub.s32 %s9, 1
      // Predicated region
      $region13: #{simple_segmentation_forward.5} parent=11 // pred_check
        %p164 = pneg %p63
      $region14: #{simple_segmentation_forward.5} parent=11 // pred_check_branch
        %166 = sbr.rel (%p164) target = $region16
      $region15: #{simple_segmentation_forward.5} parent=11 // pred_region
        %s167 = smul.u32 4, %s21
        %p168 = scmp.lt.s32.totalorder %s167, 3
        %s169 = scalar_select %p168, %s167, 3
        %p170 = scmp.lt.s32.totalorder %s23, 0
        %s171 = scalar_select %p170, %s23, 0
        %s172 = sadd.s32 %s171, %s169
        %s173 = smul.addr %s172, 4
        %s174 = scalar_lea.vmem %s0, %s173
        %s175 = smul.u32 4, %s21
      $region16: #{simple_segmentation_forward.5} parent=11 // pred_fallthru
        _
      // Predicated region
      $region17: #{simple_segmentation_forward.5} parent=11 // pred_check
        %p176 = pneg %p119
      $region18: #{simple_segmentation_forward.5} parent=11 // pred_check_branch
        %178 = sbr.rel (%p176) target = $region20
      $region19: #{simple_segmentation_forward.5} parent=11 // pred_region
        %s179 = smul.u32 4, %s21
        %p180 = scmp.lt.s32.totalorder %s179, 3
        %s181 = scalar_select %p180, %s179, 3
        %s182 = smul.addr %s181, 8
        %s183 = scalar_lea.vmem %s2, %s182
        %s184 = smul.u32 4, %s21
      $region20: #{simple_segmentation_forward.5} parent=11 // pred_fallthru
        _
    $region12: #{simple_segmentation_forward.5} parent=5 // pred_fallthru
      _
    %p185 = scmp.lt.s32.totalorder %s9, 2
    // Predicated region
    $region21: #{simple_segmentation_forward.5} parent=5 // pred_check
      %p186 = pneg %p185
    $region22: #{simple_segmentation_forward.5} parent=5 // pred_check_branch
      %188 = sbr.rel (%p186) target = $region24
    $region23: #{simple_segmentation_forward.5} parent=5 // pred_region
      // Predicated region
      $region25: #{simple_segmentation_forward.5} parent=23 // pred_check
        %p189 = pneg %p87
      $region26: #{simple_segmentation_forward.5} parent=23 // pred_check_branch
        %191 = sbr.rel (%p189) target = $region28
      $region27: #{simple_segmentation_forward.5} parent=23 // pred_region
        %s192 = smul.u32 5, %s19
        %p193 = scmp.lt.s32.totalorder %s16, 1
        %s194 = scalar_select %p193, %s16, 1
        %p195 = scmp.lt.s32.totalorder %s192, 4
        %s196 = scalar_select %p195, %s192, 4
        %p197 = scmp.lt.s32.totalorder %s18, 0
        %s198 = scalar_select %p197, %s18, 0
        %s199 = sadd.s32 %s198, %s196
        %s200 = smul.addr %s194, 5
        %s201 = sadd.s32 %s199, %s200
        %s202 = smul.addr %s201, 4
        %s203 = scalar_lea.vmem %s1, %s202
        %s204 = smul.u32 5, %s19
      $region28: #{simple_segmentation_forward.5} parent=23 // pred_fallthru
        _
    $region24: #{simple_segmentation_forward.5} parent=5 // pred_fallthru
      _
    %p205 = scmp.le.s32.totalorder 1, %s9
    %p206 = scmp.lt.s32.totalorder %s9, 3
    %p207 = pnand %p205, %p206
    %p208 = pneg %p207
    // Predicated region
    $region29: #{simple_segmentation_forward.5} parent=5 // pred_check
      _
    $region30: #{simple_segmentation_forward.5} parent=5 // pred_check_branch
      %210 = sbr.rel (%p207) target = $region32
    $region31: #{simple_segmentation_forward.5} parent=5 // pred_region
      %s211 = ssub.s32 %s9, 1
      %s212 = smul.u32 4, %s21
      %p213 = scmp.lt.s32.totalorder %s212, 3
      %s214 = scalar_select %p213, %s212, 3
      %p215 = scmp.lt.s32.totalorder %s23, 0
      %s216 = scalar_select %p215, %s23, 0
      %s217 = sadd.s32 %s216, %s214
      %s218 = smul.addr %s217, 4
      %s219 = scalar_lea.vmem %s0, %s218
      %p220 = pneg %p63
      %p221 = pneg %p60
      %s222 = smul.u32 5, %s23
      %p223 = scmp.lt.s32.totalorder %s20, 1
      %s224 = scalar_select %p223, %s20, 1
      %p225 = scmp.lt.s32.totalorder %s222, 4
      %s226 = scalar_select %p225, %s222, 4
      %p227 = scmp.lt.s32.totalorder %s22, 0
      %s228 = scalar_select %p227, %s22, 0
      %s229 = sadd.s32 %s228, %s226
      %s230 = smul.addr %s224, 5
      %s231 = sadd.s32 %s229, %s230
      %s232 = smul.addr %s231, 4
      %s233 = scalar_lea.vmem %s1, %s232
      %p234 = pneg %p93
      %p235 = pneg %p90
      %s236 = smul.u32 4, %s21
      %p237 = scmp.lt.s32.totalorder %s236, 3
      %s238 = scalar_select %p237, %s236, 3
      %s239 = smul.addr %s238, 8
      %s240 = scalar_lea.vmem %s2, %s239
      %p241 = pneg %p119
      %p242 = pneg %p116
      %p243 = pneg %p149
      %p244 = pneg %p146
      %s245 = smul.u32 4, %s21
      %p246 = scmp.lt.s32.totalorder %s20, 1
      %s247 = scalar_select %p246, %s20, 1
      %p248 = scmp.lt.s32.totalorder %s245, 3
      %s249 = scalar_select %p248, %s245, 3
      %p250 = scmp.lt.s32.totalorder %s22, 0
      %s251 = scalar_select %p250, %s22, 0
      %s252 = sadd.s32 %s251, %s249
      %s253 = smul.addr %s247, 4
      %s254 = sadd.s32 %s252, %s253
      %s255 = smul.addr %s254, 4
      %s256 = scalar_lea.vmem %s3, %s255
      %s257 = smul.u32 4, %s21
      %p258 = scmp.lt.s32.totalorder %s257, 3
      %s259 = scalar_select %p258, %s257, 3
      %p260 = scmp.lt.s32.totalorder %s23, 0
      %s261 = scalar_select %p260, %s23, 0
      %s262 = sadd.s32 %s261, %s259
      %s263 = smul.addr %s262, 4
      %s264 = scalar_lea.vmem %s0, %s263
      %s265 = smul.u32 4, %s21
      %s266 = smul.u32 5, %s23
      %p267 = scmp.lt.s32.totalorder %s20, 1
      %s268 = scalar_select %p267, %s20, 1
      %p269 = scmp.lt.s32.totalorder %s266, 4
      %s270 = scalar_select %p269, %s266, 4
      %p271 = scmp.lt.s32.totalorder %s22, 0
      %s272 = scalar_select %p271, %s22, 0
      %s273 = sadd.s32 %s272, %s270
      %s274 = smul.addr %s268, 5
      %s275 = sadd.s32 %s273, %s274
      %s276 = smul.addr %s275, 4
      %s277 = scalar_lea.vmem %s1, %s276
      %s278 = smul.u32 5, %s23
      %s279 = smul.u32 4, %s21
      %p280 = scmp.lt.s32.totalorder %s279, 3
      %s281 = scalar_select %p280, %s279, 3
      %s282 = smul.addr %s281, 8
      %s283 = scalar_lea.vmem %s2, %s282
      %s284 = smul.u32 4, %s21
      %s285 = smul.u32 4, %s21
      %p286 = scmp.lt.s32.totalorder %s20, 1
      %s287 = scalar_select %p286, %s20, 1
      %p288 = scmp.lt.s32.totalorder %s285, 3
      %s289 = scalar_select %p288, %s285, 3
      %p290 = scmp.lt.s32.totalorder %s22, 0
      %s291 = scalar_select %p290, %s22, 0
      %s292 = sadd.s32 %s291, %s289
      %s293 = smul.addr %s287, 4
      %s294 = sadd.s32 %s292, %s293
      %s295 = smul.addr %s294, 4
      %s296 = scalar_lea.vmem %s3, %s295
      %s297 = smul.u32 4, %s21
      %p299 = scmp.eq.s32.totalorder %s23, 0
      // Predicated region
      $region33: #{simple_segmentation_forward.5} parent=31 // pred_check
        %p300 = pneg %p299
      $region34: #{simple_segmentation_forward.5} parent=31 // pred_check_branch
        %302 = sbr.rel (%p300) target = $region36
      $region35: #{simple_segmentation_forward.5} parent=31 // pred_region
        %v303 = vld [vmem:[%s283] sm:$0xff]
        %v304 = vld [vmem:[%s283 + $0x8] sm:$0xff]
        %v305 = vld [vmem:[%s283 + $0x10] sm:$0xff]
        %v306 = vld [vmem:[%s283 + $0x18] sm:$0xff]
        %308 = vset.pattern.permute.xlu0 0
        %309 = vperm.xlu0 %308, %v303
        %v310 = vpop.permute.xlu0 %309
        %313 = vset.pattern.permute.xlu0 0
        %314 = vperm.xlu0 %313, %v304
        %v315 = vpop.permute.xlu0 %314
        %318 = vset.pattern.permute.xlu0 0
        %319 = vperm.xlu0 %318, %v305
        %v320 = vpop.permute.xlu0 %319
        %323 = vset.pattern.permute.xlu0 0
        %324 = vperm.xlu0 %323, %v306
        %v325 = vpop.permute.xlu0 %324
        %vm327 = vcmask 523264
        %328 = vst.msk [vmem:[#allocation2] sm:$0xff] %vm327, %v310
        %329 = vst.msk [vmem:[#allocation2 + $0x8] sm:$0xff] %vm327, %v315
        %330 = vst.msk [vmem:[#allocation2 + $0x10] sm:$0xff] %vm327, %v320
        %331 = vst.msk [vmem:[#allocation2 + $0x18] sm:$0xff] %vm327, %v325
      $region36: #{simple_segmentation_forward.5} parent=31 // pred_fallthru
        _
      %v332 = vld [vmem:[#allocation2] sm:$0xff]
      %v333 = vld [vmem:[#allocation2 + $0x8] sm:$0xff]
      %v334 = vld [vmem:[#allocation2 + $0x10] sm:$0xff]
      %v335 = vld [vmem:[#allocation2 + $0x18] sm:$0xff]
      %v336 = vld [vmem:[%s264] sm:$0xf]
      %v337 = vld [vmem:[%s264 + $0x4] sm:$0xf]
      %v338 = vld [vmem:[%s264 + $0x8] sm:$0xf]
      %v339 = vld [vmem:[%s264 + $0xc] sm:$0xf]
      %v340 = vld [vmem:[%s277] sm:$0xf]
      %v341 = vld [vmem:[%s277 + $0x4] sm:$0xf]
      %v342 = vld [vmem:[%s277 + $0x8] sm:$0xf]
      %v343 = vld [vmem:[%s277 + $0xc] sm:$0xf]
      %v344 = vld [vmem:[%s277 + $0x10] sm:$0x3]
      %v349 = vunpack.c.l.b16 %v336
      %v350 = vunpack.c.l.b16 %v337
      %v351 = vunpack.c.l.b16 %v338
      %v352 = vunpack.c.l.b16 %v339
      %v353 = vpack.c.b16 %v350, %v349
      %v354 = vpack.c.b16 %v352, %v351
      %v360 = vunpack.c.l.b16 %v340
      %v361 = vunpack.c.l.b16 %v341
      %v362 = vunpack.c.l.b16 %v342
      %v363 = vunpack.c.l.b16 %v343
      %v364 = vunpack.c.l.b16 %v344
      %v365 = vpack.c.b16 %v361, %v360
      %v366 = vpack.c.b16 %v363, %v362
      %v367 = vpack.c.b16 %v364, %v364
      %vm370 = vcmask 293888
      %v372 = vsel %vm370, %v353, 0
      %v375 = vsel %vm370, %v354, 0
      %vm377 = vcmask 1041408
      %v379 = vsel %vm377, %v367, 0
      %381 = vmatpush.bf16.msra.mxu0 0
      %382 = vmatpush.bf16.msra.mxu0 0
      %383 = vmatpush.bf16.msra.mxu0 0
      %384 = vmatpush.bf16.msra.mxu0 0
      %385 = vmatpush.bf16.msra.mxu0 0
      %386 = vmatpush.bf16.msra.mxu0 %v379
      %387 = vmatpush.bf16.msra.mxu0 %v366
      %388 = vmatpush.bf16.msra.mxu0 %v365
      %389 = vmatmul.bf16.gmra.mxu0 %v372
      %v390 = vpop.f32.mrf.mxu0
      %v391 = vadd.f32 0.0, %v390
      %v392 = vpop.f32.mrf.mxu0
      %v393 = vadd.f32 0.0, %v392
      %394 = vmatmul.bf16.gmra.mxu0 %v375
      %v395 = vpop.f32.mrf.mxu0
      %v396 = vadd.f32 0.0, %v395
      %v397 = vpop.f32.mrf.mxu0
      %v398 = vadd.f32 0.0, %v397
      %399 = vdwg.mxu0
      %v400 = vadd.f32 %v332, %v391
      %v401 = vadd.f32 %v333, %v393
      %v402 = vadd.f32 %v334, %v396
      %v403 = vadd.f32 %v335, %v398
      %vm404 = vcmask 523264
      %405 = vst.msk [vmem:[#allocation2] sm:$0xff] %vm404, %v400
      %406 = vst.msk [vmem:[#allocation2 + $0x8] sm:$0xff] %vm404, %v401
      %407 = vst.msk [vmem:[#allocation2 + $0x10] sm:$0xff] %vm404, %v402
      %408 = vst.msk [vmem:[#allocation2 + $0x18] sm:$0xff] %vm404, %v403
      // Predicated region
      $region37: #{simple_segmentation_forward.5} parent=31 // pred_check
        %p409 = pneg %p299
      $region38: #{simple_segmentation_forward.5} parent=31 // pred_check_branch
        %411 = sbr.rel (%p409) target = $region40
      $region39: #{simple_segmentation_forward.5} parent=31 // pred_region
        %v412 = vld [vmem:[#allocation2] sm:$0xff]
        %v413 = vld [vmem:[#allocation2 + $0x8] sm:$0xff]
        %v414 = vld [vmem:[#allocation2 + $0x10] sm:$0xff]
        %v415 = vld [vmem:[#allocation2 + $0x18] sm:$0xff]
        %v416 = vmax.f32 %v412, 0.0
        %v417 = vmax.f32 %v413, 0.0
        %v418 = vmax.f32 %v414, 0.0
        %v419 = vmax.f32 %v415, 0.0
        %v420 = vpack.c.bf16 %v416, %v416
        %v421 = vpack.c.bf16 %v417, %v417
        %v422 = vpack.c.bf16 %v418, %v418
        %v423 = vpack.c.bf16 %v419, %v419
        %vm424 = vcmask 519168
        %425 = vst.msk [vmem:[%s296] sm:$0xf] %vm424, %v420
        %426 = vst.msk [vmem:[%s296 + $0x4] sm:$0xf] %vm424, %v421
        %427 = vst.msk [vmem:[%s296 + $0x8] sm:$0xf] %vm424, %v422
        %428 = vst.msk [vmem:[%s296 + $0xc] sm:$0xf] %vm424, %v423
      $region40: #{simple_segmentation_forward.5} parent=31 // pred_fallthru
        _
      %s429 = smul.u32 4, %s21
      %p430 = scmp.lt.s32.totalorder %s20, 1
      %s431 = scalar_select %p430, %s20, 1
      %p432 = scmp.lt.s32.totalorder %s429, 3
      %s433 = scalar_select %p432, %s429, 3
      %p434 = scmp.lt.s32.totalorder %s22, 0
      %s435 = scalar_select %p434, %s22, 0
      %s436 = sadd.s32 %s435, %s433
      %s437 = smul.addr %s431, 4
      %s438 = sadd.s32 %s436, %s437
      %s439 = smul.addr %s438, 4
      %s440 = scalar_lea.vmem %s3, %s439
      // Predicated region
      $region41: #{simple_segmentation_forward.5} parent=31 // pred_check
        %p441 = pneg %p146
      $region42: #{simple_segmentation_forward.5} parent=31 // pred_check_branch
        %443 = sbr.rel (%p441) target = $region44
      $region43: #{simple_segmentation_forward.5} parent=31 // pred_region
        %s444 = smul.u32 4, %s21
      $region44: #{simple_segmentation_forward.5} parent=31 // pred_fallthru
        _
    $region32: #{simple_segmentation_forward.5} parent=5 // pred_fallthru
      _
    %p445 = scmp.le.s32.totalorder 2, %s9
    // Predicated region
    $region45: #{simple_segmentation_forward.5} parent=5 // pred_check
      %p446 = pneg %p445
    $region46: #{simple_segmentation_forward.5} parent=5 // pred_check_branch
      %448 = sbr.rel (%p446) target = $region48
    $region47: #{simple_segmentation_forward.5} parent=5 // pred_region
      %s449 = ssub.s32 %s9, 2
      // Predicated region
      $region49: #{simple_segmentation_forward.5} parent=47 // pred_check
        %p450 = pneg %p152
      $region50: #{simple_segmentation_forward.5} parent=47 // pred_check_branch
        %452 = sbr.rel (%p450) target = $region52
      $region51: #{simple_segmentation_forward.5} parent=47 // pred_region
        %s453 = smul.u32 4, %s25
        %p454 = scmp.lt.s32.totalorder %s24, 1
        %s455 = scalar_select %p454, %s24, 1
        %p456 = scmp.lt.s32.totalorder %s453, 3
        %s457 = scalar_select %p456, %s453, 3
        %p458 = scmp.lt.s32.totalorder %s26, 0
        %s459 = scalar_select %p458, %s26, 0
        %s460 = sadd.s32 %s459, %s457
        %s461 = smul.addr %s455, 4
        %s462 = sadd.s32 %s460, %s461
        %s463 = smul.addr %s462, 4
        %s464 = scalar_lea.vmem %s3, %s463
      $region52: #{simple_segmentation_forward.5} parent=47 // pred_fallthru
        _
    $region48: #{simple_segmentation_forward.5} parent=5 // pred_fallthru
      _
  $region6: #{simple_segmentation_forward.5} parent=0 // loop_footer
    %s13 = sadd.s32 1, %s9
  $region7: #{simple_segmentation_forward.5} parent=0 // loop_footer_branch
    %8 = sbr.rel target = $region3
  $region8: #{simple_segmentation_forward.5} parent=0 // loop_exit
    _

// kernel: simple_segmentation_forward.6
$region0: #{simple_segmentation_forward.6}
  #allocation0 [shape = 'u32[]', space=smem, size = 0x4, offset = 0x4, fixed_abs, tag = 'smem constant byte address 0x4 - core index']
  #allocation1 [shape = 'u32[72,128]{1,0:T(1,128)}', space=vmem, size = 0x9000, scoped, tag = 'internal scratch']
  #allocation2 [shape = 'f32[32,64]{1,0:T(8,128)}', space=vmem, size = 0x4000, scoped, tag = 'scratch operand']
  %s0 = inlined_call_operand.vmem [shape: bf16[32,288], index: 0, kind: input, shape index: {}]
  %s1 = inlined_call_operand.vmem [shape: bf16[2,288,64], index: 1, kind: input, shape index: {}]
  %s2 = inlined_call_operand.vmem [shape: f32[32,1], index: 2, kind: input, shape index: {}]
  %s3 = inlined_call_operand.vmem [shape: bf16[2,32,64], index: 3, kind: output, shape index: {}]
  %s4 = sld [smem:[#allocation0]]
  $region53: #{simple_segmentation_forward.6} parent=0
    _
  %s6 = ssub.s32 1, %s4
  %s7 = scalar_select 0, %s6, %s4
  loop: start=0, step=1, limit=4
  $region2: #{simple_segmentation_forward.6} parent=0 // loop_pre_header
    _
  $region3: #{simple_segmentation_forward.6} parent=0 // loop_header
    %s9 = sphi 0, %s13
    %p10 = scmp.ge.s32.totalorder %s9, 4
    %s16 = sphi 0, %s42
    %s17 = sphi 0, %s38
    %s18 = sphi 0, %s34
    %s19 = sphi 0, %s30
    %s20 = sphi 0, %s16
    %s21 = sphi 0, %s17
    %s22 = sphi 0, %s18
    %s23 = sphi 0, %s19
    %s24 = sphi 0, %s20
    %s25 = sphi 0, %s21
    %s26 = sphi 0, %s22
    %s27 = sphi 0, %s23
    %s47 = sphi 0, %s49
    %s50 = sphi 0, %s47
    %s51 = sphi 0, %s50
    %s67 = sphi 0, %s51
    %s77 = sphi 0, %s79
    %s80 = sphi 0, %s77
    %s81 = sphi 0, %s80
    %s97 = sphi 0, %s81
    %s103 = sphi 0, %s105
    %s106 = sphi 0, %s103
    %s107 = sphi 0, %s106
    %s123 = sphi 0, %s107
    %s133 = sphi 0, %s135
    %s136 = sphi 0, %s133
    %s137 = sphi 0, %s136
    %s153 = sphi 0, %s137
  $region4: #{simple_segmentation_forward.6} parent=0 // loop_header_branch
    %12 = sbr.rel (%p10) target = $region8
  $region5: #{simple_segmentation_forward.6} parent=0 // loop_body
    %s14 = ssub.s32 %s9, 1
    %s15 = ssub.s32 %s9, 2
    %s28 = sadd.s32 1, %s19
    %p29 = scmp.ge.s32.totalorder %s28, 1
    %s30 = scalar_select %p29, 0, %s28
    %s31 = sadd.s32 1, %s18
    %s32 = scalar_select %p29, %s31, %s18
    %p33 = scmp.ge.s32.totalorder %s32, 1
    %s34 = scalar_select %p33, 0, %s32
    %s35 = sadd.s32 1, %s17
    %s36 = scalar_select %p33, %s35, %s17
    %p37 = scmp.ge.s32.totalorder %s36, 1
    %s38 = scalar_select %p37, 0, %s36
    %s39 = sadd.s32 1, %s16
    %s40 = scalar_select %p37, %s39, %s16
    %p41 = scmp.ge.s32.totalorder %s40, 2
    %s42 = scalar_select %p41, 0, %s40
    %s43 = ssub.s32 %s17, %s38
    %s44 = ssub.s32 %s19, %s30
    %s45 = sor.u32 %s43, %s44
    %p46 = scmp.eq.s32.totalorder %s45, 0
    %s48 = sadd.s32 %s47, 1
    %s49 = scalar_select %p46, %s47, %s48
    %p52 = pneg %p46
    %p53 = scmp.eq.s32.totalorder %s9, 1
    %p54 = por %p52, %p53
    %p55 = scmp.ne.s32.totalorder %s47, %s50
    %p56 = scmp.eq.s32.totalorder %s9, 0
    %p57 = por %p55, %p56
    %p58 = scmp.ne.s32.totalorder %s47, %s50
    %p59 = scmp.eq.s32.totalorder %s14, 1
    %p60 = por %p58, %p59
    %p61 = scmp.ne.s32.totalorder %s50, %s51
    %p62 = scmp.eq.s32.totalorder %s14, 0
    %p63 = por %p61, %p62
    %p64 = scmp.ne.s32.totalorder %s50, %s51
    %p65 = scmp.eq.s32.totalorder %s15, 1
    %p66 = por %p64, %p65
    %p68 = scmp.ne.s32.totalorder %s51, %s67
    %p69 = scmp.eq.s32.totalorder %s15, 0
    %p70 = por %p68, %p69
    %s71 = ssub.s32 %s16, %s42
    %s72 = ssub.s32 %s19, %s30
    %s73 = sor.u32 %s71, %s72
    %s74 = ssub.s32 %s18, %s34
    %s75 = sor.u32 %s73, %s74
    %p76 = scmp.eq.s32.totalorder %s75, 0
    %s78 = sadd.s32 %s77, 1
    %s79 = scalar_select %p76, %s77, %s78
    %p82 = pneg %p76
    %p83 = scmp.eq.s32.totalorder %s9, 1
    %p84 = por %p82, %p83
    %p85 = scmp.ne.s32.totalorder %s77, %s80
    %p86 = scmp.eq.s32.totalorder %s9, 0
    %p87 = por %p85, %p86
    %p88 = scmp.ne.s32.totalorder %s77, %s80
    %p89 = scmp.eq.s32.totalorder %s14, 1
    %p90 = por %p88, %p89
    %p91 = scmp.ne.s32.totalorder %s80, %s81
    %p92 = scmp.eq.s32.totalorder %s14, 0
    %p93 = por %p91, %p92
    %p94 = scmp.ne.s32.totalorder %s80, %s81
    %p95 = scmp.eq.s32.totalorder %s15, 1
    %p96 = por %p94, %p95
    %p98 = scmp.ne.s32.totalorder %s81, %s97
    %p99 = scmp.eq.s32.totalorder %s15, 0
    %p100 = por %p98, %p99
    %s101 = ssub.s32 %s17, %s38
    %p102 = scmp.eq.s32.totalorder %s101, 0
    %s104 = sadd.s32 %s103, 1
    %s105 = scalar_select %p102, %s103, %s104
    %p108 = pneg %p102
    %p109 = scmp.eq.s32.totalorder %s9, 1
    %p110 = por %p108, %p109
    %p111 = scmp.ne.s32.totalorder %s103, %s106
    %p112 = scmp.eq.s32.totalorder %s9, 0
    %p113 = por %p111, %p112
    %p114 = scmp.ne.s32.totalorder %s103, %s106
    %p115 = scmp.eq.s32.totalorder %s14, 1
    %p116 = por %p114, %p115
    %p117 = scmp.ne.s32.totalorder %s106, %s107
    %p118 = scmp.eq.s32.totalorder %s14, 0
    %p119 = por %p117, %p118
    %p120 = scmp.ne.s32.totalorder %s106, %s107
    %p121 = scmp.eq.s32.totalorder %s15, 1
    %p122 = por %p120, %p121
    %p124 = scmp.ne.s32.totalorder %s107, %s123
    %p125 = scmp.eq.s32.totalorder %s15, 0
    %p126 = por %p124, %p125
    %s127 = ssub.s32 %s16, %s42
    %s128 = ssub.s32 %s17, %s38
    %s129 = sor.u32 %s127, %s128
    %s130 = ssub.s32 %s18, %s34
    %s131 = sor.u32 %s129, %s130
    %p132 = scmp.eq.s32.totalorder %s131, 0
    %s134 = sadd.s32 %s133, 1
    %s135 = scalar_select %p132, %s133, %s134
    %p138 = pneg %p132
    %p139 = scmp.eq.s32.totalorder %s9, 1
    %p140 = por %p138, %p139
    %p141 = scmp.ne.s32.totalorder %s133, %s136
    %p142 = scmp.eq.s32.totalorder %s9, 0
    %p143 = por %p141, %p142
    %p144 = scmp.ne.s32.totalorder %s133, %s136
    %p145 = scmp.eq.s32.totalorder %s14, 1
    %p146 = por %p144, %p145
    %p147 = scmp.ne.s32.totalorder %s136, %s137
    %p148 = scmp.eq.s32.totalorder %s14, 0
    %p149 = por %p147, %p148
    %p150 = scmp.ne.s32.totalorder %s136, %s137
    %p151 = scmp.eq.s32.totalorder %s15, 1
    %p152 = por %p150, %p151
    %p154 = scmp.ne.s32.totalorder %s137, %s153
    %p155 = scmp.eq.s32.totalorder %s15, 0
    %p156 = por %p154, %p155
    %p157 = scmp.le.s32.totalorder 1, %s9
    %p158 = scmp.lt.s32.totalorder %s9, 3
    %p159 = pnand %p157, %p158
    %p160 = pneg %p159
    // Predicated region
    $region9: #{simple_segmentation_forward.6} parent=5 // pred_check
      _
    $region10: #{simple_segmentation_forward.6} parent=5 // pred_check_branch
      %162 = sbr.rel (%p159) target = $region12
    $region11: #{simple_segmentation_forward.6} parent=5 // pred_region
      %s163 = ssub.s32 %s9, 1
      // Predicated region
      $region13: #{simple_segmentation_forward.6} parent=11 // pred_check
        %p164 = pneg %p63
      $region14: #{simple_segmentation_forward.6} parent=11 // pred_check_branch
        %166 = sbr.rel (%p164) target = $region16
      $region15: #{simple_segmentation_forward.6} parent=11 // pred_region
        %s167 = smul.u32 4, %s21
        %s168 = smul.u32 3, %s23
        %p169 = scmp.lt.s32.totalorder %s167, 3
        %s170 = scalar_select %p169, %s167, 3
        %p171 = scmp.lt.s32.totalorder %s168, 2
        %s172 = scalar_select %p171, %s168, 2
        %s173 = smul.addr %s170, 3
        %s174 = sadd.s32 %s172, %s173
        %s175 = smul.addr %s174, 4
        %s176 = scalar_lea.vmem %s0, %s175
        %s177 = smul.u32 4, %s21
        %s178 = smul.u32 3, %s23
      $region16: #{simple_segmentation_forward.6} parent=11 // pred_fallthru
        _
      // Predicated region
      $region17: #{simple_segmentation_forward.6} parent=11 // pred_check
        %p179 = pneg %p119
      $region18: #{simple_segmentation_forward.6} parent=11 // pred_check_branch
        %181 = sbr.rel (%p179) target = $region20
      $region19: #{simple_segmentation_forward.6} parent=11 // pred_region
        %s182 = smul.u32 4, %s21
        %p183 = scmp.lt.s32.totalorder %s182, 3
        %s184 = scalar_select %p183, %s182, 3
        %s185 = smul.addr %s184, 8
        %s186 = scalar_lea.vmem %s2, %s185
        %s187 = smul.u32 4, %s21
      $region20: #{simple_segmentation_forward.6} parent=11 // pred_fallthru
        _
    $region12: #{simple_segmentation_forward.6} parent=5 // pred_fallthru
      _
    %p188 = scmp.lt.s32.totalorder %s9, 2
    // Predicated region
    $region21: #{simple_segmentation_forward.6} parent=5 // pred_check
      %p189 = pneg %p188
    $region22: #{simple_segmentation_forward.6} parent=5 // pred_check_branch
      %191 = sbr.rel (%p189) target = $region24
    $region23: #{simple_segmentation_forward.6} parent=5 // pred_region
      // Predicated region
      $region25: #{simple_segmentation_forward.6} parent=23 // pred_check
        %p192 = pneg %p87
      $region26: #{simple_segmentation_forward.6} parent=23 // pred_check_branch
        %194 = sbr.rel (%p192) target = $region28
      $region27: #{simple_segmentation_forward.6} parent=23 // pred_region
        %s195 = smul.u32 36, %s19
        %p196 = scmp.lt.s32.totalorder %s16, 1
        %s197 = scalar_select %p196, %s16, 1
        %p198 = scmp.lt.s32.totalorder %s195, 35
        %s199 = scalar_select %p198, %s195, 35
        %p200 = scmp.lt.s32.totalorder %s18, 0
        %s201 = scalar_select %p200, %s18, 0
        %s202 = sadd.s32 %s201, %s199
        %s203 = smul.addr %s197, 36
        %s204 = sadd.s32 %s202, %s203
        %s205 = smul.addr %s204, 4
        %s206 = scalar_lea.vmem %s1, %s205
        %s207 = smul.u32 36, %s19
      $region28: #{simple_segmentation_forward.6} parent=23 // pred_fallthru
        _
    $region24: #{simple_segmentation_forward.6} parent=5 // pred_fallthru
      _
    %p208 = scmp.le.s32.totalorder 1, %s9
    %p209 = scmp.lt.s32.totalorder %s9, 3
    %p210 = pnand %p208, %p209
    %p211 = pneg %p210
    // Predicated region
    $region29: #{simple_segmentation_forward.6} parent=5 // pred_check
      _
    $region30: #{simple_segmentation_forward.6} parent=5 // pred_check_branch
      %213 = sbr.rel (%p210) target = $region32
    $region31: #{simple_segmentation_forward.6} parent=5 // pred_region
      %s214 = ssub.s32 %s9, 1
      %s215 = smul.u32 4, %s21
      %s216 = smul.u32 3, %s23
      %p217 = scmp.lt.s32.totalorder %s215, 3
      %s218 = scalar_select %p217, %s215, 3
      %p219 = scmp.lt.s32.totalorder %s216, 2
      %s220 = scalar_select %p219, %s216, 2
      %s221 = smul.addr %s218, 3
      %s222 = sadd.s32 %s220, %s221
      %s223 = smul.addr %s222, 4
      %s224 = scalar_lea.vmem %s0, %s223
      %p225 = pneg %p63
      %p226 = pneg %p60
      %s227 = smul.u32 36, %s23
      %p228 = scmp.lt.s32.totalorder %s20, 1
      %s229 = scalar_select %p228, %s20, 1
      %p230 = scmp.lt.s32.totalorder %s227, 35
      %s231 = scalar_select %p230, %s227, 35
      %p232 = scmp.lt.s32.totalorder %s22, 0
      %s233 = scalar_select %p232, %s22, 0
      %s234 = sadd.s32 %s233, %s231
      %s235 = smul.addr %s229, 36
      %s236 = sadd.s32 %s234, %s235
      %s237 = smul.addr %s236, 4
      %s238 = scalar_lea.vmem %s1, %s237
      %p239 = pneg %p93
      %p240 = pneg %p90
      %s241 = smul.u32 4, %s21
      %p242 = scmp.lt.s32.totalorder %s241, 3
      %s243 = scalar_select %p242, %s241, 3
      %s244 = smul.addr %s243, 8
      %s245 = scalar_lea.vmem %s2, %s244
      %p246 = pneg %p119
      %p247 = pneg %p116
      %p248 = pneg %p149
      %p249 = pneg %p146
      %s250 = smul.u32 4, %s21
      %p251 = scmp.lt.s32.totalorder %s20, 1
      %s252 = scalar_select %p251, %s20, 1
      %p253 = scmp.lt.s32.totalorder %s250, 3
      %s254 = scalar_select %p253, %s250, 3
      %p255 = scmp.lt.s32.totalorder %s22, 0
      %s256 = scalar_select %p255, %s22, 0
      %s257 = sadd.s32 %s256, %s254
      %s258 = smul.addr %s252, 4
      %s259 = sadd.s32 %s257, %s258
      %s260 = smul.addr %s259, 4
      %s261 = scalar_lea.vmem %s3, %s260
      %s262 = smul.u32 4, %s21
      %s263 = smul.u32 3, %s23
      %p264 = scmp.lt.s32.totalorder %s262, 3
      %s265 = scalar_select %p264, %s262, 3
      %p266 = scmp.lt.s32.totalorder %s263, 2
      %s267 = scalar_select %p266, %s263, 2
      %s268 = smul.addr %s265, 3
      %s269 = sadd.s32 %s267, %s268
      %s270 = smul.addr %s269, 4
      %s271 = scalar_lea.vmem %s0, %s270
      %s272 = smul.u32 4, %s21
      %s273 = smul.u32 3, %s23
      %s274 = smul.u32 36, %s23
      %p275 = scmp.lt.s32.totalorder %s20, 1
      %s276 = scalar_select %p275, %s20, 1
      %p277 = scmp.lt.s32.totalorder %s274, 35
      %s278 = scalar_select %p277, %s274, 35
      %p279 = scmp.lt.s32.totalorder %s22, 0
      %s280 = scalar_select %p279, %s22, 0
      %s281 = sadd.s32 %s280, %s278
      %s282 = smul.addr %s276, 36
      %s283 = sadd.s32 %s281, %s282
      %s284 = smul.addr %s283, 4
      %s285 = scalar_lea.vmem %s1, %s284
      %s286 = smul.u32 36, %s23
      %s287 = smul.u32 4, %s21
      %p288 = scmp.lt.s32.totalorder %s287, 3
      %s289 = scalar_select %p288, %s287, 3
      %s290 = smul.addr %s289, 8
      %s291 = scalar_lea.vmem %s2, %s290
      %s292 = smul.u32 4, %s21
      %s293 = smul.u32 4, %s21
      %p294 = scmp.lt.s32.totalorder %s20, 1
      %s295 = scalar_select %p294, %s20, 1
      %p296 = scmp.lt.s32.totalorder %s293, 3
      %s297 = scalar_select %p296, %s293, 3
      %p298 = scmp.lt.s32.totalorder %s22, 0
      %s299 = scalar_select %p298, %s22, 0
      %s300 = sadd.s32 %s299, %s297
      %s301 = smul.addr %s295, 4
      %s302 = sadd.s32 %s300, %s301
      %s303 = smul.addr %s302, 4
      %s304 = scalar_lea.vmem %s3, %s303
      %s305 = smul.u32 4, %s21
      %p307 = scmp.eq.s32.totalorder %s23, 0
      // Predicated region
      $region33: #{simple_segmentation_forward.6} parent=31 // pred_check
        %p308 = pneg %p307
      $region34: #{simple_segmentation_forward.6} parent=31 // pred_check_branch
        %310 = sbr.rel (%p308) target = $region36
      $region35: #{simple_segmentation_forward.6} parent=31 // pred_region
        %v311 = vld [vmem:[%s291] sm:$0xff]
        %v312 = vld [vmem:[%s291 + $0x8] sm:$0xff]
        %v313 = vld [vmem:[%s291 + $0x10] sm:$0xff]
        %v314 = vld [vmem:[%s291 + $0x18] sm:$0xff]
        %316 = vset.pattern.permute.xlu0 0
        %317 = vperm.xlu0 %316, %v311
        %v318 = vpop.permute.xlu0 %317
        %321 = vset.pattern.permute.xlu0 0
        %322 = vperm.xlu0 %321, %v312
        %v323 = vpop.permute.xlu0 %322
        %326 = vset.pattern.permute.xlu0 0
        %327 = vperm.xlu0 %326, %v313
        %v328 = vpop.permute.xlu0 %327
        %331 = vset.pattern.permute.xlu0 0
        %332 = vperm.xlu0 %331, %v314
        %v333 = vpop.permute.xlu0 %332
        %vm335 = vcmask 523264
        %336 = vst.msk [vmem:[#allocation2] sm:$0xff] %vm335, %v318
        %337 = vst.msk [vmem:[#allocation2 + $0x8] sm:$0xff] %vm335, %v323
        %338 = vst.msk [vmem:[#allocation2 + $0x10] sm:$0xff] %vm335, %v328
        %339 = vst.msk [vmem:[#allocation2 + $0x18] sm:$0xff] %vm335, %v333
      $region36: #{simple_segmentation_forward.6} parent=31 // pred_fallthru
        _
      %v340 = vld [vmem:[#allocation2] sm:$0xff]
      %v341 = vld [vmem:[#allocation2 + $0x8] sm:$0xff]
      %v342 = vld [vmem:[#allocation2 + $0x10] sm:$0xff]
      %v343 = vld [vmem:[#allocation2 + $0x18] sm:$0xff]
      %v344 = vld [vmem:[%s271] sm:$0xff]
      %v345 = vld [vmem:[%s271 + $0x8] sm:$0xf]
      %v346 = vld [vmem:[%s271 + $0xc] sm:$0xff]
      %v347 = vld [vmem:[%s271 + $0x14] sm:$0xf]
      %v348 = vld [vmem:[%s271 + $0x18] sm:$0xff]
      %v349 = vld [vmem:[%s271 + $0x20] sm:$0xf]
      %v350 = vld [vmem:[%s271 + $0x24] sm:$0xff]
      %v351 = vld [vmem:[%s271 + $0x2c] sm:$0xf]
      %v352 = vld [vmem:[%s285] sm:$0xf]
      %v353 = vld [vmem:[%s285 + $0x4] sm:$0xf]
      %v354 = vld [vmem:[%s285 + $0x8] sm:$0xf]
      %v355 = vld [vmem:[%s285 + $0xc] sm:$0xf]
      %v356 = vld [vmem:[%s285 + $0x10] sm:$0xf]
      %v357 = vld [vmem:[%s285 + $0x14] sm:$0xf]
      %v358 = vld [vmem:[%s285 + $0x18] sm:$0xf]
      %v359 = vld [vmem:[%s285 + $0x1c] sm:$0xf]
      %v360 = vld [vmem:[%s285 + $0x20] sm:$0xf]
      %v361 = vld [vmem:[%s285 + $0x24] sm:$0xf]
      %v362 = vld [vmem:[%s285 + $0x28] sm:$0xf]
      %v363 = vld [vmem:[%s285 + $0x2c] sm:$0xf]
      %v364 = vld [vmem:[%s285 + $0x30] sm:$0xf]
      %v365 = vld [vmem:[%s285 + $0x34] sm:$0xf]
      %v366 = vld [vmem:[%s285 + $0x38] sm:$0xf]
      %v367 = vld [vmem:[%s285 + $0x3c] sm:$0xf]
      %v368 = vld [vmem:[%s285 + $0x40] sm:$0xf]
      %v369 = vld [vmem:[%s285 + $0x44] sm:$0xf]
      %v370 = vld [vmem:[%s285 + $0x48] sm:$0xf]
      %v371 = vld [vmem:[%s285 + $0x4c] sm:$0xf]
      %v372 = vld [vmem:[%s285 + $0x50] sm:$0xf]
      %v373 = vld [vmem:[%s285 + $0x54] sm:$0xf]
      %v374 = vld [vmem:[%s285 + $0x58] sm:$0xf]
      %v375 = vld [vmem:[%s285 + $0x5c] sm:$0xf]
      %v376 = vld [vmem:[%s285 + $0x60] sm:$0xf]
      %v377 = vld [vmem:[%s285 + $0x64] sm:$0xf]
      %v378 = vld [vmem:[%s285 + $0x68] sm:$0xf]
      %v379 = vld [vmem:[%s285 + $0x6c] sm:$0xf]
      %v380 = vld [vmem:[%s285 + $0x70] sm:$0xf]
      %v381 = vld [vmem:[%s285 + $0x74] sm:$0xf]
      %v382 = vld [vmem:[%s285 + $0x78] sm:$0xf]
      %v383 = vld [vmem:[%s285 + $0x7c] sm:$0xf]
      %v384 = vld [vmem:[%s285 + $0x80] sm:$0xf]
      %v385 = vld [vmem:[%s285 + $0x84] sm:$0xf]
      %v386 = vld [vmem:[%s285 + $0x88] sm:$0xf]
      %v387 = vld [vmem:[%s285 + $0x8c] sm:$0xf]
      %v396 = vunpack.c.l.b16 %v344
      %v397 = vunpack.c.h.b16 %v344
      %v398 = vunpack.c.l.b16 %v345
      %v399 = vunpack.c.l.b16 %v346
      %v400 = vunpack.c.h.b16 %v346
      %v401 = vunpack.c.l.b16 %v347
      %v402 = vunpack.c.l.b16 %v348
      %v403 = vunpack.c.h.b16 %v348
      %v404 = vunpack.c.l.b16 %v349
      %v405 = vunpack.c.l.b16 %v350
      %v406 = vunpack.c.h.b16 %v350
      %v407 = vunpack.c.l.b16 %v351
      %v408 = vpack.c.b16 %v399, %v396
      %v409 = vpack.c.b16 %v400, %v397
      %v410 = vpack.c.b16 %v401, %v398
      %v411 = vpack.c.b16 %v405, %v402
      %v412 = vpack.c.b16 %v406, %v403
      %v413 = vpack.c.b16 %v407, %v404
      %v454 = vunpack.c.l.b16 %v352
      %v455 = vunpack.c.l.b16 %v353
      %v456 = vunpack.c.l.b16 %v354
      %v457 = vunpack.c.l.b16 %v355
      %v458 = vunpack.c.l.b16 %v356
      %v459 = vunpack.c.l.b16 %v357
      %v460 = vunpack.c.l.b16 %v358
      %v461 = vunpack.c.l.b16 %v359
      %v462 = vunpack.c.l.b16 %v360
      %v463 = vunpack.c.l.b16 %v361
      %v464 = vunpack.c.l.b16 %v362
      %v465 = vunpack.c.l.b16 %v363
      %v466 = vunpack.c.l.b16 %v364
      %v467 = vunpack.c.l.b16 %v365
      %v468 = vunpack.c.l.b16 %v366
      %v469 = vunpack.c.l.b16 %v367
      %v470 = vunpack.c.l.b16 %v368
      %v471 = vunpack.c.l.b16 %v369
      %v472 = vunpack.c.l.b16 %v370
      %v473 = vunpack.c.l.b16 %v371
      %v474 = vunpack.c.l.b16 %v372
      %v475 = vunpack.c.l.b16 %v373
      %v476 = vunpack.c.l.b16 %v374
      %v477 = vunpack.c.l.b16 %v375
      %v478 = vunpack.c.l.b16 %v376
      %v479 = vunpack.c.l.b16 %v377
      %v480 = vunpack.c.l.b16 %v378
      %v481 = vunpack.c.l.b16 %v379
      %v482 = vunpack.c.l.b16 %v380
      %v483 = vunpack.c.l.b16 %v381
      %v484 = vunpack.c.l.b16 %v382
      %v485 = vunpack.c.l.b16 %v383
      %v486 = vunpack.c.l.b16 %v384
      %v487 = vunpack.c.l.b16 %v385
      %v488 = vunpack.c.l.b16 %v386
      %v489 = vunpack.c.l.b16 %v387
      %v490 = vpack.c.b16 %v455, %v454
      %v491 = vpack.c.b16 %v457, %v456
      %v492 = vpack.c.b16 %v459, %v458
      %v493 = vpack.c.b16 %v461, %v460
      %v494 = vpack.c.b16 %v463, %v462
      %v495 = vpack.c.b16 %v465, %v464
      %v496 = vpack.c.b16 %v467, %v466
      %v497 = vpack.c.b16 %v469, %v468
      %v498 = vpack.c.b16 %v471, %v470
      %v499 = vpack.c.b16 %v473, %v472
      %v500 = vpack.c.b16 %v475, %v474
      %v501 = vpack.c.b16 %v477, %v476
      %v502 = vpack.c.b16 %v479, %v478
      %v503 = vpack.c.b16 %v481, %v480
      %v504 = vpack.c.b16 %v483, %v482
      %v505 = vpack.c.b16 %v485, %v484
      %v506 = vpack.c.b16 %v487, %v486
      %v507 = vpack.c.b16 %v489, %v488
      %vm526 = vcmask 261120
      %v528 = vsel %vm526, %v410, 0
      %v531 = vsel %vm526, %v413, 0
      %533 = vmatpush.bf16.msra.mxu0 %v497
      %534 = vmatpush.bf16.msra.mxu0 %v496
      %535 = vmatpush.bf16.msra.mxu0 %v495
      %536 = vmatpush.bf16.msra.mxu0 %v494
      %537 = vmatpush.bf16.msra.mxu0 %v493
      %538 = vmatpush.bf16.msra.mxu0 %v492
      %539 = vmatpush.bf16.msra.mxu0 %v491
      %540 = vmatpush.bf16.msra.mxu0 %v490
      %541 = vmatmul.bf16.gmra.mxu0 %v408
      %v542 = vpop.f32.mrf.mxu0
      %v543 = vadd.f32 0.0, %v542
      %v544 = vpop.f32.mrf.mxu0
      %v545 = vadd.f32 0.0, %v544
      %546 = vmatmul.bf16.gmra.mxu0 %v411
      %v547 = vpop.f32.mrf.mxu0
      %v548 = vadd.f32 0.0, %v547
      %v549 = vpop.f32.mrf.mxu0
      %v550 = vadd.f32 0.0, %v549
      %551 = vdwg.mxu0
      %552 = vmatpush.bf16.msra.mxu0 %v505
      %553 = vmatpush.bf16.msra.mxu0 %v504
      %554 = vmatpush.bf16.msra.mxu0 %v503
      %555 = vmatpush.bf16.msra.mxu0 %v502
      %556 = vmatpush.bf16.msra.mxu0 %v501
      %557 = vmatpush.bf16.msra.mxu0 %v500
      %558 = vmatpush.bf16.msra.mxu0 %v499
      %559 = vmatpush.bf16.msra.mxu0 %v498
      %560 = vmatmul.bf16.gmra.mxu0 %v409
      %v561 = vpop.f32.mrf.mxu0
      %v562 = vadd.f32 %v543, %v561
      %v563 = vpop.f32.mrf.mxu0
      %v564 = vadd.f32 %v545, %v563
      %565 = vmatmul.bf16.gmra.mxu0 %v412
      %v566 = vpop.f32.mrf.mxu0
      %v567 = vadd.f32 %v548, %v566
      %v568 = vpop.f32.mrf.mxu0
      %v569 = vadd.f32 %v550, %v568
      %570 = vdwg.mxu0
      %571 = vmatpush.bf16.msra.mxu0 0
      %572 = vmatpush.bf16.msra.mxu0 0
      %573 = vmatpush.bf16.msra.mxu0 0
      %574 = vmatpush.bf16.msra.mxu0 0
      %575 = vmatpush.bf16.msra.mxu0 0
      %576 = vmatpush.bf16.msra.mxu0 0
      %577 = vmatpush.bf16.msra.mxu0 %v507
      %578 = vmatpush.bf16.msra.mxu0 %v506
      %579 = vmatmul.bf16.gmra.mxu0 %v528
      %v580 = vpop.f32.mrf.mxu0
      %v581 = vadd.f32 %v562, %v580
      %v582 = vpop.f32.mrf.mxu0
      %v583 = vadd.f32 %v564, %v582
      %584 = vmatmul.bf16.gmra.mxu0 %v531
      %v585 = vpop.f32.mrf.mxu0
      %v586 = vadd.f32 %v567, %v585
      %v587 = vpop.f32.mrf.mxu0
      %v588 = vadd.f32 %v569, %v587
      %589 = vdwg.mxu0
      %v590 = vadd.f32 %v340, %v581
      %v591 = vadd.f32 %v341, %v583
      %v592 = vadd.f32 %v342, %v586
      %v593 = vadd.f32 %v343, %v588
      %vm594 = vcmask 523264
      %595 = vst.msk [vmem:[#allocation2] sm:$0xff] %vm594, %v590
      %596 = vst.msk [vmem:[#allocation2 + $0x8] sm:$0xff] %vm594, %v591
      %597 = vst.msk [vmem:[#allocation2 + $0x10] sm:$0xff] %vm594, %v592
      %598 = vst.msk [vmem:[#allocation2 + $0x18] sm:$0xff] %vm594, %v593
      // Predicated region
      $region37: #{simple_segmentation_forward.6} parent=31 // pred_check
        %p599 = pneg %p307
      $region38: #{simple_segmentation_forward.6} parent=31 // pred_check_branch
        %601 = sbr.rel (%p599) target = $region40
      $region39: #{simple_segmentation_forward.6} parent=31 // pred_region
        %v602 = vld [vmem:[#allocation2] sm:$0xff]
        %v603 = vld [vmem:[#allocation2 + $0x8] sm:$0xff]
        %v604 = vld [vmem:[#allocation2 + $0x10] sm:$0xff]
        %v605 = vld [vmem:[#allocation2 + $0x18] sm:$0xff]
        %v606 = vmax.f32 %v602, 0.0
        %v607 = vmax.f32 %v603, 0.0
        %v608 = vmax.f32 %v604, 0.0
        %v609 = vmax.f32 %v605, 0.0
        %v610 = vpack.c.bf16 %v606, %v606
        %v611 = vpack.c.bf16 %v607, %v607
        %v612 = vpack.c.bf16 %v608, %v608
        %v613 = vpack.c.bf16 %v609, %v609
        %vm614 = vcmask 519168
        %615 = vst.msk [vmem:[%s304] sm:$0xf] %vm614, %v610
        %616 = vst.msk [vmem:[%s304 + $0x4] sm:$0xf] %vm614, %v611
        %617 = vst.msk [vmem:[%s304 + $0x8] sm:$0xf] %vm614, %v612
        %618 = vst.msk [vmem:[%s304 + $0xc] sm:$0xf] %vm614, %v613
      $region40: #{simple_segmentation_forward.6} parent=31 // pred_fallthru
        _
      %s619 = smul.u32 4, %s21
      %p620 = scmp.lt.s32.totalorder %s20, 1
      %s621 = scalar_select %p620, %s20, 1
      %p622 = scmp.lt.s32.totalorder %s619, 3
      %s623 = scalar_select %p622, %s619, 3
      %p624 = scmp.lt.s32.totalorder %s22, 0
      %s625 = scalar_select %p624, %s22, 0
      %s626 = sadd.s32 %s625, %s623
      %s627 = smul.addr %s621, 4
      %s628 = sadd.s32 %s626, %s627
      %s629 = smul.addr %s628, 4
      %s630 = scalar_lea.vmem %s3, %s629
      // Predicated region
      $region41: #{simple_segmentation_forward.6} parent=31 // pred_check
        %p631 = pneg %p146
      $region42: #{simple_segmentation_forward.6} parent=31 // pred_check_branch
        %633 = sbr.rel (%p631) target = $region44
      $region43: #{simple_segmentation_forward.6} parent=31 // pred_region
        %s634 = smul.u32 4, %s21
      $region44: #{simple_segmentation_forward.6} parent=31 // pred_fallthru
        _
    $region32: #{simple_segmentation_forward.6} parent=5 // pred_fallthru
      _
    %p635 = scmp.le.s32.totalorder 2, %s9
    // Predicated region
    $region45: #{simple_segmentation_forward.6} parent=5 // pred_check
      %p636 = pneg %p635
    $region46: #{simple_segmentation_forward.6} parent=5 // pred_check_branch
      %638 = sbr.rel (%p636) target = $region48
    $region47: #{simple_segmentation_forward.6} parent=5 // pred_region
      %s639 = ssub.s32 %s9, 2
      // Predicated region
      $region49: #{simple_segmentation_forward.6} parent=47 // pred_check
        %p640 = pneg %p152
      $region50: #{simple_segmentation_forward.6} parent=47 // pred_check_branch
        %642 = sbr.rel (%p640) target = $region52
      $region51: #{simple_segmentation_forward.6} parent=47 // pred_region
        %s643 = smul.u32 4, %s25
        %p644 = scmp.lt.s32.totalorder %s24, 1
        %s645 = scalar_select %p644, %s24, 1
        %p646 = scmp.lt.s32.totalorder %s643, 3
        %s647 = scalar_select %p646, %s643, 3
        %p648 = scmp.lt.s32.totalorder %s26, 0
        %s649 = scalar_select %p648, %s26, 0
        %s650 = sadd.s32 %s649, %s647
        %s651 = smul.addr %s645, 4
        %s652 = sadd.s32 %s650, %s651
        %s653 = smul.addr %s652, 4
        %s654 = scalar_lea.vmem %s3, %s653
      $region52: #{simple_segmentation_forward.6} parent=47 // pred_fallthru
        _
    $region48: #{simple_segmentation_forward.6} parent=5 // pred_fallthru
      _
  $region6: #{simple_segmentation_forward.6} parent=0 // loop_footer
    %s13 = sadd.s32 1, %s9
  $region7: #{simple_segmentation_forward.6} parent=0 // loop_footer_branch
    %8 = sbr.rel target = $region3
  $region8: #{simple_segmentation_forward.6} parent=0 // loop_exit
    _

// kernel: simple_segmentation_forward.7
$region0: #{simple_segmentation_forward.7}
  #allocation0 [shape = 'u32[]', space=smem, size = 0x4, offset = 0x4, fixed_abs, tag = 'smem constant byte address 0x4 - core index']
  #allocation1 [shape = 'u32[72,128]{1,0:T(1,128)}', space=vmem, size = 0x9000, scoped, tag = 'internal scratch']
  #allocation2 [shape = 'f32[8,64]{1,0:T(8,128)}', space=vmem, size = 0x1000, scoped, tag = 'scratch operand']
  %s0 = inlined_call_operand.vmem [shape: bf16[8,32], index: 0, kind: input, shape index: {}]
  %s1 = inlined_call_operand.vmem [shape: bf16[2,32,64], index: 1, kind: input, shape index: {}]
  %s2 = inlined_call_operand.vmem [shape: f32[8,1], index: 2, kind: input, shape index: {}]
  %s3 = inlined_call_operand.vmem [shape: bf16[2,8,64], index: 3, kind: output, shape index: {}]
  %s4 = sld [smem:[#allocation0]]
  $region53: #{simple_segmentation_forward.7} parent=0
    _
  %s6 = ssub.s32 1, %s4
  %s7 = scalar_select 0, %s6, %s4
  loop: start=0, step=1, limit=4
  $region2: #{simple_segmentation_forward.7} parent=0 // loop_pre_header
    _
  $region3: #{simple_segmentation_forward.7} parent=0 // loop_header
    %s9 = sphi 0, %s13
    %p10 = scmp.ge.s32.totalorder %s9, 4
    %s16 = sphi 0, %s42
    %s17 = sphi 0, %s38
    %s18 = sphi 0, %s34
    %s19 = sphi 0, %s30
    %s20 = sphi 0, %s16
    %s21 = sphi 0, %s17
    %s22 = sphi 0, %s18
    %s23 = sphi 0, %s19
    %s24 = sphi 0, %s20
    %s25 = sphi 0, %s21
    %s26 = sphi 0, %s22
    %s27 = sphi 0, %s23
    %s47 = sphi 0, %s49
    %s50 = sphi 0, %s47
    %s51 = sphi 0, %s50
    %s67 = sphi 0, %s51
    %s77 = sphi 0, %s79
    %s80 = sphi 0, %s77
    %s81 = sphi 0, %s80
    %s97 = sphi 0, %s81
    %s103 = sphi 0, %s105
    %s106 = sphi 0, %s103
    %s107 = sphi 0, %s106
    %s123 = sphi 0, %s107
    %s133 = sphi 0, %s135
    %s136 = sphi 0, %s133
    %s137 = sphi 0, %s136
    %s153 = sphi 0, %s137
  $region4: #{simple_segmentation_forward.7} parent=0 // loop_header_branch
    %12 = sbr.rel (%p10) target = $region8
  $region5: #{simple_segmentation_forward.7} parent=0 // loop_body
    %s14 = ssub.s32 %s9, 1
    %s15 = ssub.s32 %s9, 2
    %s28 = sadd.s32 1, %s19
    %p29 = scmp.ge.s32.totalorder %s28, 1
    %s30 = scalar_select %p29, 0, %s28
    %s31 = sadd.s32 1, %s18
    %s32 = scalar_select %p29, %s31, %s18
    %p33 = scmp.ge.s32.totalorder %s32, 1
    %s34 = scalar_select %p33, 0, %s32
    %s35 = sadd.s32 1, %s17
    %s36 = scalar_select %p33, %s35, %s17
    %p37 = scmp.ge.s32.totalorder %s36, 1
    %s38 = scalar_select %p37, 0, %s36
    %s39 = sadd.s32 1, %s16
    %s40 = scalar_select %p37, %s39, %s16
    %p41 = scmp.ge.s32.totalorder %s40, 2
    %s42 = scalar_select %p41, 0, %s40
    %s43 = ssub.s32 %s17, %s38
    %s44 = ssub.s32 %s19, %s30
    %s45 = sor.u32 %s43, %s44
    %p46 = scmp.eq.s32.totalorder %s45, 0
    %s48 = sadd.s32 %s47, 1
    %s49 = scalar_select %p46, %s47, %s48
    %p52 = pneg %p46
    %p53 = scmp.eq.s32.totalorder %s9, 1
    %p54 = por %p52, %p53
    %p55 = scmp.ne.s32.totalorder %s47, %s50
    %p56 = scmp.eq.s32.totalorder %s9, 0
    %p57 = por %p55, %p56
    %p58 = scmp.ne.s32.totalorder %s47, %s50
    %p59 = scmp.eq.s32.totalorder %s14, 1
    %p60 = por %p58, %p59
    %p61 = scmp.ne.s32.totalorder %s50, %s51
    %p62 = scmp.eq.s32.totalorder %s14, 0
    %p63 = por %p61, %p62
    %p64 = scmp.ne.s32.totalorder %s50, %s51
    %p65 = scmp.eq.s32.totalorder %s15, 1
    %p66 = por %p64, %p65
    %p68 = scmp.ne.s32.totalorder %s51, %s67
    %p69 = scmp.eq.s32.totalorder %s15, 0
    %p70 = por %p68, %p69
    %s71 = ssub.s32 %s16, %s42
    %s72 = ssub.s32 %s19, %s30
    %s73 = sor.u32 %s71, %s72
    %s74 = ssub.s32 %s18, %s34
    %s75 = sor.u32 %s73, %s74
    %p76 = scmp.eq.s32.totalorder %s75, 0
    %s78 = sadd.s32 %s77, 1
    %s79 = scalar_select %p76, %s77, %s78
    %p82 = pneg %p76
    %p83 = scmp.eq.s32.totalorder %s9, 1
    %p84 = por %p82, %p83
    %p85 = scmp.ne.s32.totalorder %s77, %s80
    %p86 = scmp.eq.s32.totalorder %s9, 0
    %p87 = por %p85, %p86
    %p88 = scmp.ne.s32.totalorder %s77, %s80
    %p89 = scmp.eq.s32.totalorder %s14, 1
    %p90 = por %p88, %p89
    %p91 = scmp.ne.s32.totalorder %s80, %s81
    %p92 = scmp.eq.s32.totalorder %s14, 0
    %p93 = por %p91, %p92
    %p94 = scmp.ne.s32.totalorder %s80, %s81
    %p95 = scmp.eq.s32.totalorder %s15, 1
    %p96 = por %p94, %p95
    %p98 = scmp.ne.s32.totalorder %s81, %s97
    %p99 = scmp.eq.s32.totalorder %s15, 0
    %p100 = por %p98, %p99
    %s101 = ssub.s32 %s17, %s38
    %p102 = scmp.eq.s32.totalorder %s101, 0
    %s104 = sadd.s32 %s103, 1
    %s105 = scalar_select %p102, %s103, %s104
    %p108 = pneg %p102
    %p109 = scmp.eq.s32.totalorder %s9, 1
    %p110 = por %p108, %p109
    %p111 = scmp.ne.s32.totalorder %s103, %s106
    %p112 = scmp.eq.s32.totalorder %s9, 0
    %p113 = por %p111, %p112
    %p114 = scmp.ne.s32.totalorder %s103, %s106
    %p115 = scmp.eq.s32.totalorder %s14, 1
    %p116 = por %p114, %p115
    %p117 = scmp.ne.s32.totalorder %s106, %s107
    %p118 = scmp.eq.s32.totalorder %s14, 0
    %p119 = por %p117, %p118
    %p120 = scmp.ne.s32.totalorder %s106, %s107
    %p121 = scmp.eq.s32.totalorder %s15, 1
    %p122 = por %p120, %p121
    %p124 = scmp.ne.s32.totalorder %s107, %s123
    %p125 = scmp.eq.s32.totalorder %s15, 0
    %p126 = por %p124, %p125
    %s127 = ssub.s32 %s16, %s42
    %s128 = ssub.s32 %s17, %s38
    %s129 = sor.u32 %s127, %s128
    %s130 = ssub.s32 %s18, %s34
    %s131 = sor.u32 %s129, %s130
    %p132 = scmp.eq.s32.totalorder %s131, 0
    %s134 = sadd.s32 %s133, 1
    %s135 = scalar_select %p132, %s133, %s134
    %p138 = pneg %p132
    %p139 = scmp.eq.s32.totalorder %s9, 1
    %p140 = por %p138, %p139
    %p141 = scmp.ne.s32.totalorder %s133, %s136
    %p142 = scmp.eq.s32.totalorder %s9, 0
    %p143 = por %p141, %p142
    %p144 = scmp.ne.s32.totalorder %s133, %s136
    %p145 = scmp.eq.s32.totalorder %s14, 1
    %p146 = por %p144, %p145
    %p147 = scmp.ne.s32.totalorder %s136, %s137
    %p148 = scmp.eq.s32.totalorder %s14, 0
    %p149 = por %p147, %p148
    %p150 = scmp.ne.s32.totalorder %s136, %s137
    %p151 = scmp.eq.s32.totalorder %s15, 1
    %p152 = por %p150, %p151
    %p154 = scmp.ne.s32.totalorder %s137, %s153
    %p155 = scmp.eq.s32.totalorder %s15, 0
    %p156 = por %p154, %p155
    %p157 = scmp.le.s32.totalorder 1, %s9
    %p158 = scmp.lt.s32.totalorder %s9, 3
    %p159 = pnand %p157, %p158
    %p160 = pneg %p159
    // Predicated region
    $region9: #{simple_segmentation_forward.7} parent=5 // pred_check
      _
    $region10: #{simple_segmentation_forward.7} parent=5 // pred_check_branch
      %162 = sbr.rel (%p159) target = $region12
    $region11: #{simple_segmentation_forward.7} parent=5 // pred_region
      %s163 = ssub.s32 %s9, 1
      // Predicated region
      $region13: #{simple_segmentation_forward.7} parent=11 // pred_check
        %p164 = pneg %p63
      $region14: #{simple_segmentation_forward.7} parent=11 // pred_check_branch
        %166 = sbr.rel (%p164) target = $region16
      $region15: #{simple_segmentation_forward.7} parent=11 // pred_region
        %p167 = scmp.lt.s32.totalorder %s21, 0
        %s168 = scalar_select %p167, %s21, 0
        %p169 = scmp.lt.s32.totalorder %s23, 0
        %s170 = scalar_select %p169, %s23, 0
        %s171 = sadd.s32 %s170, %s168
        %s172 = smul.addr %s171, 4
        %s173 = scalar_lea.vmem %s0, %s172
      $region16: #{simple_segmentation_forward.7} parent=11 // pred_fallthru
        _
      // Predicated region
      $region17: #{simple_segmentation_forward.7} parent=11 // pred_check
        %p174 = pneg %p119
      $region18: #{simple_segmentation_forward.7} parent=11 // pred_check_branch
        %176 = sbr.rel (%p174) target = $region20
      $region19: #{simple_segmentation_forward.7} parent=11 // pred_region
        %p177 = scmp.lt.s32.totalorder %s21, 0
        %s178 = scalar_select %p177, %s21, 0
        %s179 = smul.addr %s178, 8
        %s180 = scalar_lea.vmem %s2, %s179
      $region20: #{simple_segmentation_forward.7} parent=11 // pred_fallthru
        _
    $region12: #{simple_segmentation_forward.7} parent=5 // pred_fallthru
      _
    %p181 = scmp.lt.s32.totalorder %s9, 2
    // Predicated region
    $region21: #{simple_segmentation_forward.7} parent=5 // pred_check
      %p182 = pneg %p181
    $region22: #{simple_segmentation_forward.7} parent=5 // pred_check_branch
      %184 = sbr.rel (%p182) target = $region24
    $region23: #{simple_segmentation_forward.7} parent=5 // pred_region
      // Predicated region
      $region25: #{simple_segmentation_forward.7} parent=23 // pred_check
        %p185 = pneg %p87
      $region26: #{simple_segmentation_forward.7} parent=23 // pred_check_branch
        %187 = sbr.rel (%p185) target = $region28
      $region27: #{simple_segmentation_forward.7} parent=23 // pred_region
        %s188 = smul.u32 4, %s19
        %p189 = scmp.lt.s32.totalorder %s16, 1
        %s190 = scalar_select %p189, %s16, 1
        %p191 = scmp.lt.s32.totalorder %s188, 3
        %s192 = scalar_select %p191, %s188, 3
        %p193 = scmp.lt.s32.totalorder %s18, 0
        %s194 = scalar_select %p193, %s18, 0
        %s195 = sadd.s32 %s194, %s192
        %s196 = smul.addr %s190, 4
        %s197 = sadd.s32 %s195, %s196
        %s198 = smul.addr %s197, 4
        %s199 = scalar_lea.vmem %s1, %s198
        %s200 = smul.u32 4, %s19
      $region28: #{simple_segmentation_forward.7} parent=23 // pred_fallthru
        _
    $region24: #{simple_segmentation_forward.7} parent=5 // pred_fallthru
      _
    %p201 = scmp.le.s32.totalorder 1, %s9
    %p202 = scmp.lt.s32.totalorder %s9, 3
    %p203 = pnand %p201, %p202
    %p204 = pneg %p203
    // Predicated region
    $region29: #{simple_segmentation_forward.7} parent=5 // pred_check
      _
    $region30: #{simple_segmentation_forward.7} parent=5 // pred_check_branch
      %206 = sbr.rel (%p203) target = $region32
    $region31: #{simple_segmentation_forward.7} parent=5 // pred_region
      %s207 = ssub.s32 %s9, 1
      %p208 = scmp.lt.s32.totalorder %s21, 0
      %s209 = scalar_select %p208, %s21, 0
      %p210 = scmp.lt.s32.totalorder %s23, 0
      %s211 = scalar_select %p210, %s23, 0
      %s212 = sadd.s32 %s211, %s209
      %s213 = smul.addr %s212, 4
      %s214 = scalar_lea.vmem %s0, %s213
      %p215 = pneg %p63
      %p216 = pneg %p60
      %s217 = smul.u32 4, %s23
      %p218 = scmp.lt.s32.totalorder %s20, 1
      %s219 = scalar_select %p218, %s20, 1
      %p220 = scmp.lt.s32.totalorder %s217, 3
      %s221 = scalar_select %p220, %s217, 3
      %p222 = scmp.lt.s32.totalorder %s22, 0
      %s223 = scalar_select %p222, %s22, 0
      %s224 = sadd.s32 %s223, %s221
      %s225 = smul.addr %s219, 4
      %s226 = sadd.s32 %s224, %s225
      %s227 = smul.addr %s226, 4
      %s228 = scalar_lea.vmem %s1, %s227
      %p229 = pneg %p93
      %p230 = pneg %p90
      %p231 = scmp.lt.s32.totalorder %s21, 0
      %s232 = scalar_select %p231, %s21, 0
      %s233 = smul.addr %s232, 8
      %s234 = scalar_lea.vmem %s2, %s233
      %p235 = pneg %p119
      %p236 = pneg %p116
      %p237 = pneg %p149
      %p238 = pneg %p146
      %p239 = scmp.lt.s32.totalorder %s20, 1
      %s240 = scalar_select %p239, %s20, 1
      %p241 = scmp.lt.s32.totalorder %s21, 0
      %s242 = scalar_select %p241, %s21, 0
      %p243 = scmp.lt.s32.totalorder %s22, 0
      %s244 = scalar_select %p243, %s22, 0
      %s245 = sadd.s32 %s244, %s242
      %s246 = sadd.s32 %s245, %s240
      %s247 = smul.addr %s246, 4
      %s248 = scalar_lea.vmem %s3, %s247
      %p249 = scmp.lt.s32.totalorder %s21, 0
      %s250 = scalar_select %p249, %s21, 0
      %p251 = scmp.lt.s32.totalorder %s23, 0
      %s252 = scalar_select %p251, %s23, 0
      %s253 = sadd.s32 %s252, %s250
      %s254 = smul.addr %s253, 4
      %s255 = scalar_lea.vmem %s0, %s254
      %s256 = smul.u32 4, %s23
      %p257 = scmp.lt.s32.totalorder %s20, 1
      %s258 = scalar_select %p257, %s20, 1
      %p259 = scmp.lt.s32.totalorder %s256, 3
      %s260 = scalar_select %p259, %s256, 3
      %p261 = scmp.lt.s32.totalorder %s22, 0
      %s262 = scalar_select %p261, %s22, 0
      %s263 = sadd.s32 %s262, %s260
      %s264 = smul.addr %s258, 4
      %s265 = sadd.s32 %s263, %s264
      %s266 = smul.addr %s265, 4
      %s267 = scalar_lea.vmem %s1, %s266
      %s268 = smul.u32 4, %s23
      %p269 = scmp.lt.s32.totalorder %s21, 0
      %s270 = scalar_select %p269, %s21, 0
      %s271 = smul.addr %s270, 8
      %s272 = scalar_lea.vmem %s2, %s271
      %p273 = scmp.lt.s32.totalorder %s20, 1
      %s274 = scalar_select %p273, %s20, 1
      %p275 = scmp.lt.s32.totalorder %s21, 0
      %s276 = scalar_select %p275, %s21, 0
      %p277 = scmp.lt.s32.totalorder %s22, 0
      %s278 = scalar_select %p277, %s22, 0
      %s279 = sadd.s32 %s278, %s276
      %s280 = sadd.s32 %s279, %s274
      %s281 = smul.addr %s280, 4
      %s282 = scalar_lea.vmem %s3, %s281
      %p284 = scmp.eq.s32.totalorder %s23, 0
      // Predicated region
      $region33: #{simple_segmentation_forward.7} parent=31 // pred_check
        %p285 = pneg %p284
      $region34: #{simple_segmentation_forward.7} parent=31 // pred_check_branch
        %287 = sbr.rel (%p285) target = $region36
      $region35: #{simple_segmentation_forward.7} parent=31 // pred_region
        %v288 = vld [vmem:[%s272] sm:$0xff]
        %290 = vset.pattern.permute.xlu0 0
        %291 = vperm.xlu0 %290, %v288
        %v292 = vpop.permute.xlu0 %291
        %vm294 = vcmask 523264
        %295 = vst.msk [vmem:[#allocation2] sm:$0xff] %vm294, %v292
      $region36: #{simple_segmentation_forward.7} parent=31 // pred_fallthru
        _
      %v296 = vld [vmem:[#allocation2] sm:$0xff]
      %v297 = vld [vmem:[%s255] sm:$0xf]
      %v298 = vld [vmem:[%s267] sm:$0xf]
      %v299 = vld [vmem:[%s267 + $0x4] sm:$0xf]
      %v300 = vld [vmem:[%s267 + $0x8] sm:$0xf]
      %v301 = vld [vmem:[%s267 + $0xc] sm:$0xf]
      %v306 = vunpack.c.l.b16 %v298
      %v307 = vunpack.c.l.b16 %v299
      %v308 = vunpack.c.l.b16 %v300
      %v309 = vunpack.c.l.b16 %v301
      %v310 = vpack.c.b16 %v307, %v306
      %v311 = vpack.c.b16 %v309, %v308
      %vm314 = vcmask 261120
      %v316 = vsel %vm314, %v297, 0
      %318 = vmatpush.bf16.msra.mxu0 0
      %319 = vmatpush.bf16.msra.mxu0 0
      %320 = vmatpush.bf16.msra.mxu0 0
      %321 = vmatpush.bf16.msra.mxu0 0
      %322 = vmatpush.bf16.msra.mxu0 0
      %323 = vmatpush.bf16.msra.mxu0 0
      %324 = vmatpush.bf16.msra.mxu0 %v311
      %325 = vmatpush.bf16.msra.mxu0 %v310
      %326 = vmatmul.bf16.gmra.mxu0 %v316
      %v327 = vpop.f32.mrf.mxu0
      %v328 = vadd.f32 0.0, %v327
      %v329 = vpop.f32.mrf.mxu0
      %330 = vdwg.mxu0
      %v331 = vadd.f32 %v296, %v328
      %vm332 = vcmask 523264
      %333 = vst.msk [vmem:[#allocation2] sm:$0xff] %vm332, %v331
      // Predicated region
      $region37: #{simple_segmentation_forward.7} parent=31 // pred_check
        %p334 = pneg %p284
      $region38: #{simple_segmentation_forward.7} parent=31 // pred_check_branch
        %336 = sbr.rel (%p334) target = $region40
      $region39: #{simple_segmentation_forward.7} parent=31 // pred_region
        %v337 = vld [vmem:[#allocation2] sm:$0xff]
        %v338 = vpack.c.bf16 %v337, %v337
        %vm339 = vcmask 519168
        %340 = vst.msk [vmem:[%s282] sm:$0xf] %vm339, %v338
      $region40: #{simple_segmentation_forward.7} parent=31 // pred_fallthru
        _
      %p341 = scmp.lt.s32.totalorder %s20, 1
      %s342 = scalar_select %p341, %s20, 1
      %p343 = scmp.lt.s32.totalorder %s21, 0
      %s344 = scalar_select %p343, %s21, 0
      %p345 = scmp.lt.s32.totalorder %s22, 0
      %s346 = scalar_select %p345, %s22, 0
      %s347 = sadd.s32 %s346, %s344
      %s348 = sadd.s32 %s347, %s342
      %s349 = smul.addr %s348, 4
      %s350 = scalar_lea.vmem %s3, %s349
      // Predicated region
      $region41: #{simple_segmentation_forward.7} parent=31 // pred_check
        %p351 = pneg %p146
      $region42: #{simple_segmentation_forward.7} parent=31 // pred_check_branch
        %353 = sbr.rel (%p351) target = $region44
      $region43: #{simple_segmentation_forward.7} parent=31 // pred_region
        _
      $region44: #{simple_segmentation_forward.7} parent=31 // pred_fallthru
        _
    $region32: #{simple_segmentation_forward.7} parent=5 // pred_fallthru
      _
    %p354 = scmp.le.s32.totalorder 2, %s9
    // Predicated region
    $region45: #{simple_segmentation_forward.7} parent=5 // pred_check
      %p355 = pneg %p354
    $region46: #{simple_segmentation_forward.7} parent=5 // pred_check_branch
      %357 = sbr.rel (%p355) target = $region48
    $region47: #{simple_segmentation_forward.7} parent=5 // pred_region
      %s358 = ssub.s32 %s9, 2
      // Predicated region
      $region49: #{simple_segmentation_forward.7} parent=47 // pred_check
        %p359 = pneg %p152
      $region50: #{simple_segmentation_forward.7} parent=47 // pred_check_branch
        %361 = sbr.rel (%p359) target = $region52
      $region51: #{simple_segmentation_forward.7} parent=47 // pred_region
        %p362 = scmp.lt.s32.totalorder %s24, 1
        %s363 = scalar_select %p362, %s24, 1
        %p364 = scmp.lt.s32.totalorder %s25, 0
        %s365 = scalar_select %p364, %s25, 0
        %p366 = scmp.lt.s32.totalorder %s26, 0
        %s367 = scalar_select %p366, %s26, 0
        %s368 = sadd.s32 %s367, %s365
        %s369 = sadd.s32 %s368, %s363
        %s370 = smul.addr %s369, 4
        %s371 = scalar_lea.vmem %s3, %s370
      $region52: #{simple_segmentation_forward.7} parent=47 // pred_fallthru
        _
    $region48: #{simple_segmentation_forward.7} parent=5 // pred_fallthru
      _
  $region6: #{simple_segmentation_forward.7} parent=0 // loop_footer
    %s13 = sadd.s32 1, %s9
  $region7: #{simple_segmentation_forward.7} parent=0 // loop_footer_branch
    %8 = sbr.rel target = $region3
  $region8: #{simple_segmentation_forward.7} parent=0 // loop_exit
    _

// kernel: simple_segmentation_forward.9
$region0: #{simple_segmentation_forward.9}
  #allocation0 [shape = 'u32[]', space=smem, size = 0x4, offset = 0x4, fixed_abs, tag = 'smem constant byte address 0x4 - core index']
  #allocation1 [shape = 'u32[72,128]{1,0:T(1,128)}', space=vmem, size = 0x9000, scoped, tag = 'internal scratch']
  %s0 = inlined_call_operand.vmem [shape: bf16[2,8,8,8], index: 0, kind: input, shape index: {}]
  %s1 = inlined_call_operand.vmem [shape: bf16[2,8,8,8], index: 1, kind: input, shape index: {}]
  %s2 = inlined_call_operand.vmem [shape: bf16[16,8], index: 2, kind: input, shape index: {}]
  %s3 = inlined_call_operand.vmem [shape: bf16[8,16], index: 3, kind: input, shape index: {}]
  %s4 = inlined_call_operand.vmem [shape: f32[2,2,8,16,16], index: 4, kind: output, shape index: {}]
  %s5 = sld [smem:[#allocation0]]
  $region49: #{simple_segmentation_forward.9} parent=0
    _
  %s7 = ssub.s32 1, %s5
  %s8 = scalar_select 0, %s7, %s5
  loop: start=0, step=1, limit=4
  $region2: #{simple_segmentation_forward.9} parent=0 // loop_pre_header
    _
  $region3: #{simple_segmentation_forward.9} parent=0 // loop_header
    %s10 = sphi 0, %s14
    %p11 = scmp.ge.s32.totalorder %s10, 4
    %s20 = sphi 0, %s22
    %s23 = sphi 0, %s20
    %s24 = sphi 0, %s23
    %s40 = sphi 0, %s24
    %s46 = sphi 0, %s48
    %s49 = sphi 0, %s46
    %s50 = sphi 0, %s49
    %s66 = sphi 0, %s50
    %s70 = sphi 0, %s70
    %s72 = sphi 0, %s70
    %s73 = sphi 0, %s72
    %s87 = sphi 0, %s73
    %s91 = sphi 0, %s91
    %s93 = sphi 0, %s91
    %s94 = sphi 0, %s93
    %s108 = sphi 0, %s94
    %s114 = sphi 0, %s116
    %s117 = sphi 0, %s114
    %s118 = sphi 0, %s117
    %s134 = sphi 0, %s118
  $region4: #{simple_segmentation_forward.9} parent=0 // loop_header_branch
    %13 = sbr.rel (%p11) target = $region8
  $region5: #{simple_segmentation_forward.9} parent=0 // loop_body
    %s15 = ssub.s32 %s10, 1
    %s16 = ssub.s32 %s10, 2
    %s17 = sadd.s32 %s10, 1
    %s18 = ssub.s32 %s10, %s17
    %p19 = scmp.eq.s32.totalorder %s18, 0
    %s21 = sadd.s32 %s20, 1
    %s22 = scalar_select %p19, %s20, %s21
    %p25 = pneg %p19
    %p26 = scmp.eq.s32.totalorder %s10, 1
    %p27 = por %p25, %p26
    %p28 = scmp.ne.s32.totalorder %s20, %s23
    %p29 = scmp.eq.s32.totalorder %s10, 0
    %p30 = por %p28, %p29
    %p31 = scmp.ne.s32.totalorder %s20, %s23
    %p32 = scmp.eq.s32.totalorder %s15, 1
    %p33 = por %p31, %p32
    %p34 = scmp.ne.s32.totalorder %s23, %s24
    %p35 = scmp.eq.s32.totalorder %s15, 0
    %p36 = por %p34, %p35
    %p37 = scmp.ne.s32.totalorder %s23, %s24
    %p38 = scmp.eq.s32.totalorder %s16, 1
    %p39 = por %p37, %p38
    %p41 = scmp.ne.s32.totalorder %s24, %s40
    %p42 = scmp.eq.s32.totalorder %s16, 0
    %p43 = por %p41, %p42
    %s44 = ssub.s32 %s10, %s17
    %p45 = scmp.eq.s32.totalorder %s44, 0
    %s47 = sadd.s32 %s46, 1
    %s48 = scalar_select %p45, %s46, %s47
    %p51 = pneg %p45
    %p52 = scmp.eq.s32.totalorder %s10, 1
    %p53 = por %p51, %p52
    %p54 = scmp.ne.s32.totalorder %s46, %s49
    %p55 = scmp.eq.s32.totalorder %s10, 0
    %p56 = por %p54, %p55
    %p57 = scmp.ne.s32.totalorder %s46, %s49
    %p58 = scmp.eq.s32.totalorder %s15, 1
    %p59 = por %p57, %p58
    %p60 = scmp.ne.s32.totalorder %s49, %s50
    %p61 = scmp.eq.s32.totalorder %s15, 0
    %p62 = por %p60, %p61
    %p63 = scmp.ne.s32.totalorder %s49, %s50
    %p64 = scmp.eq.s32.totalorder %s16, 1
    %p65 = por %p63, %p64
    %p67 = scmp.ne.s32.totalorder %s50, %s66
    %p68 = scmp.eq.s32.totalorder %s16, 0
    %p69 = por %p67, %p68
    %s71 = sadd.s32 %s70, 1
    %p74 = scmp.eq.s32.totalorder %s10, 1
    %p75 = scmp.ne.s32.totalorder %s70, %s72
    %p76 = scmp.eq.s32.totalorder %s10, 0
    %p77 = por %p75, %p76
    %p78 = scmp.ne.s32.totalorder %s70, %s72
    %p79 = scmp.eq.s32.totalorder %s15, 1
    %p80 = por %p78, %p79
    %p81 = scmp.ne.s32.totalorder %s72, %s73
    %p82 = scmp.eq.s32.totalorder %s15, 0
    %p83 = por %p81, %p82
    %p84 = scmp.ne.s32.totalorder %s72, %s73
    %p85 = scmp.eq.s32.totalorder %s16, 1
    %p86 = por %p84, %p85
    %p88 = scmp.ne.s32.totalorder %s73, %s87
    %p89 = scmp.eq.s32.totalorder %s16, 0
    %p90 = por %p88, %p89
    %s92 = sadd.s32 %s91, 1
    %p95 = scmp.eq.s32.totalorder %s10, 1
    %p96 = scmp.ne.s32.totalorder %s91, %s93
    %p97 = scmp.eq.s32.totalorder %s10, 0
    %p98 = por %p96, %p97
    %p99 = scmp.ne.s32.totalorder %s91, %s93
    %p100 = scmp.eq.s32.totalorder %s15, 1
    %p101 = por %p99, %p100
    %p102 = scmp.ne.s32.totalorder %s93, %s94
    %p103 = scmp.eq.s32.totalorder %s15, 0
    %p104 = por %p102, %p103
    %p105 = scmp.ne.s32.totalorder %s93, %s94
    %p106 = scmp.eq.s32.totalorder %s16, 1
    %p107 = por %p105, %p106
    %p109 = scmp.ne.s32.totalorder %s94, %s108
    %p110 = scmp.eq.s32.totalorder %s16, 0
    %p111 = por %p109, %p110
    %s112 = ssub.s32 %s10, %s17
    %p113 = scmp.eq.s32.totalorder %s112, 0
    %s115 = sadd.s32 %s114, 1
    %s116 = scalar_select %p113, %s114, %s115
    %p119 = pneg %p113
    %p120 = scmp.eq.s32.totalorder %s10, 1
    %p121 = por %p119, %p120
    %p122 = scmp.ne.s32.totalorder %s114, %s117
    %p123 = scmp.eq.s32.totalorder %s10, 0
    %p124 = por %p122, %p123
    %p125 = scmp.ne.s32.totalorder %s114, %s117
    %p126 = scmp.eq.s32.totalorder %s15, 1
    %p127 = por %p125, %p126
    %p128 = scmp.ne.s32.totalorder %s117, %s118
    %p129 = scmp.eq.s32.totalorder %s15, 0
    %p130 = por %p128, %p129
    %p131 = scmp.ne.s32.totalorder %s117, %s118
    %p132 = scmp.eq.s32.totalorder %s16, 1
    %p133 = por %p131, %p132
    %p135 = scmp.ne.s32.totalorder %s118, %s134
    %p136 = scmp.eq.s32.totalorder %s16, 0
    %p137 = por %p135, %p136
    %p138 = scmp.le.s32.totalorder 1, %s10
    %p139 = scmp.lt.s32.totalorder %s10, 3
    %p140 = pnand %p138, %p139
    %p141 = pneg %p140
    // Predicated region
    $region9: #{simple_segmentation_forward.9} parent=5 // pred_check
      _
    $region10: #{simple_segmentation_forward.9} parent=5 // pred_check_branch
      %143 = sbr.rel (%p140) target = $region12
    $region11: #{simple_segmentation_forward.9} parent=5 // pred_region
      %s144 = ssub.s32 %s10, 1
      // Predicated region
      $region13: #{simple_segmentation_forward.9} parent=11 // pred_check
        %p145 = pneg %p83
      $region14: #{simple_segmentation_forward.9} parent=11 // pred_check_branch
        %147 = sbr.rel (%p145) target = $region16
      $region15: #{simple_segmentation_forward.9} parent=11 // pred_region
        _
      $region16: #{simple_segmentation_forward.9} parent=11 // pred_fallthru
        _
      // Predicated region
      $region17: #{simple_segmentation_forward.9} parent=11 // pred_check
        %p148 = pneg %p104
      $region18: #{simple_segmentation_forward.9} parent=11 // pred_check_branch
        %150 = sbr.rel (%p148) target = $region20
      $region19: #{simple_segmentation_forward.9} parent=11 // pred_region
        _
      $region20: #{simple_segmentation_forward.9} parent=11 // pred_fallthru
        _
    $region12: #{simple_segmentation_forward.9} parent=5 // pred_fallthru
      _
    %p151 = scmp.lt.s32.totalorder %s10, 2
    // Predicated region
    $region21: #{simple_segmentation_forward.9} parent=5 // pred_check
      %p152 = pneg %p151
    $region22: #{simple_segmentation_forward.9} parent=5 // pred_check_branch
      %154 = sbr.rel (%p152) target = $region24
    $region23: #{simple_segmentation_forward.9} parent=5 // pred_region
      // Predicated region
      $region25: #{simple_segmentation_forward.9} parent=23 // pred_check
        %p155 = pneg %p30
      $region26: #{simple_segmentation_forward.9} parent=23 // pred_check_branch
        %157 = sbr.rel (%p155) target = $region28
      $region27: #{simple_segmentation_forward.9} parent=23 // pred_region
        %p158 = scmp.lt.s32.totalorder %s10, 1
        %s159 = scalar_select %p158, %s10, 1
        %s160 = smul.addr %s159, 8
        %s161 = smul.addr %s160, 4
        %s162 = scalar_lea.vmem %s0, %s161
      $region28: #{simple_segmentation_forward.9} parent=23 // pred_fallthru
        _
      // Predicated region
      $region29: #{simple_segmentation_forward.9} parent=23 // pred_check
        %p163 = pneg %p56
      $region30: #{simple_segmentation_forward.9} parent=23 // pred_check_branch
        %165 = sbr.rel (%p163) target = $region32
      $region31: #{simple_segmentation_forward.9} parent=23 // pred_region
        %p166 = scmp.lt.s32.totalorder %s10, 1
        %s167 = scalar_select %p166, %s10, 1
        %s168 = smul.addr %s167, 8
        %s169 = smul.addr %s168, 4
        %s170 = scalar_lea.vmem %s1, %s169
      $region32: #{simple_segmentation_forward.9} parent=23 // pred_fallthru
        _
    $region24: #{simple_segmentation_forward.9} parent=5 // pred_fallthru
      _
    %p171 = scmp.le.s32.totalorder 1, %s10
    %p172 = scmp.lt.s32.totalorder %s10, 3
    %p173 = pnand %p171, %p172
    %p174 = pneg %p173
    // Predicated region
    $region33: #{simple_segmentation_forward.9} parent=5 // pred_check
      _
    $region34: #{simple_segmentation_forward.9} parent=5 // pred_check_branch
      %176 = sbr.rel (%p173) target = $region36
    $region35: #{simple_segmentation_forward.9} parent=5 // pred_region
      %s177 = ssub.s32 %s10, 1
      %p178 = scmp.lt.s32.totalorder %s15, 1
      %s179 = scalar_select %p178, %s15, 1
      %s180 = smul.addr %s179, 8
      %s181 = smul.addr %s180, 4
      %s182 = scalar_lea.vmem %s0, %s181
      %p183 = pneg %p36
      %p184 = pneg %p33
      %p185 = scmp.lt.s32.totalorder %s15, 1
      %s186 = scalar_select %p185, %s15, 1
      %s187 = smul.addr %s186, 8
      %s188 = smul.addr %s187, 4
      %s189 = scalar_lea.vmem %s1, %s188
      %p190 = pneg %p62
      %p191 = pneg %p59
      %p192 = pneg %p83
      %p193 = pneg %p80
      %p194 = pneg %p104
      %p195 = pneg %p101
      %p196 = pneg %p130
      %p197 = pneg %p127
      %p198 = scmp.lt.s32.totalorder %s15, 1
      %s199 = scalar_select %p198, %s15, 1
      %s200 = smul.addr %s199, 32
      %s201 = smul.addr %s200, 8
      %s202 = scalar_lea.vmem %s4, %s201
      %p203 = scmp.lt.s32.totalorder %s15, 1
      %s204 = scalar_select %p203, %s15, 1
      %s205 = smul.addr %s204, 8
      %s206 = smul.addr %s205, 4
      %s207 = scalar_lea.vmem %s0, %s206
      %p208 = scmp.lt.s32.totalorder %s15, 1
      %s209 = scalar_select %p208, %s15, 1
      %s210 = smul.addr %s209, 8
      %s211 = smul.addr %s210, 4
      %s212 = scalar_lea.vmem %s1, %s211
      %p213 = scmp.lt.s32.totalorder %s15, 1
      %s214 = scalar_select %p213, %s15, 1
      %s215 = smul.addr %s214, 32
      %s216 = smul.addr %s215, 8
      %s217 = scalar_lea.vmem %s4, %s216
      %v219 = vld [vmem:[%s3] sm:$0xf]
      %v220 = vld [vmem:[%s2] sm:$0xf]
      %v221 = vld [vmem:[%s2 + $0x4] sm:$0xf]
      %v222 = vld [vmem:[%s207] sm:$0xf]
      %v223 = vld [vmem:[%s207 + $0x4] sm:$0xf]
      %v224 = vld [vmem:[%s207 + $0x8] sm:$0xf]
      %v225 = vld [vmem:[%s207 + $0xc] sm:$0xf]
      %v226 = vld [vmem:[%s207 + $0x10] sm:$0xf]
      %v227 = vld [vmem:[%s207 + $0x14] sm:$0xf]
      %v228 = vld [vmem:[%s207 + $0x18] sm:$0xf]
      %v229 = vld [vmem:[%s207 + $0x1c] sm:$0xf]
      %vm230 = vcmask 64512
      %v232 = vsel %vm230, %v222, 0
      %vm234 = vcmask 1043456
      %v236 = vsel %vm234, %v219, 0
      %238 = vmatpush.bf16.msra.mxu0 0
      %239 = vmatpush.bf16.msra.mxu0 0
      %240 = vmatpush.bf16.msra.mxu0 0
      %241 = vmatpush.bf16.msra.mxu0 0
      %242 = vmatpush.bf16.msra.mxu0 0
      %243 = vmatpush.bf16.msra.mxu0 0
      %244 = vmatpush.bf16.msra.mxu0 0
      %245 = vmatpush.bf16.msra.mxu0 %v236
      %246 = vmatmul.bf16.gmra.mxu0 %v232
      %v247 = vpop.f32.mrf.mxu0
      %v248 = vadd.f32 0.0, %v247
      %v249 = vpop.f32.mrf.mxu0
      %250 = vdwg.mxu0
      %v252 = vsel %vm230, %v223, 0
      %254 = vmatpush.bf16.msra.mxu0 0
      %255 = vmatpush.bf16.msra.mxu0 0
      %256 = vmatpush.bf16.msra.mxu0 0
      %257 = vmatpush.bf16.msra.mxu0 0
      %258 = vmatpush.bf16.msra.mxu0 0
      %259 = vmatpush.bf16.msra.mxu0 0
      %260 = vmatpush.bf16.msra.mxu0 0
      %261 = vmatpush.bf16.msra.mxu0 %v236
      %262 = vmatmul.bf16.gmra.mxu0 %v252
      %v263 = vpop.f32.mrf.mxu0
      %v264 = vadd.f32 0.0, %v263
      %v265 = vpop.f32.mrf.mxu0
      %266 = vdwg.mxu0
      %v268 = vsel %vm230, %v224, 0
      %270 = vmatpush.bf16.msra.mxu0 0
      %271 = vmatpush.bf16.msra.mxu0 0
      %272 = vmatpush.bf16.msra.mxu0 0
      %273 = vmatpush.bf16.msra.mxu0 0
      %274 = vmatpush.bf16.msra.mxu0 0
      %275 = vmatpush.bf16.msra.mxu0 0
      %276 = vmatpush.bf16.msra.mxu0 0
      %277 = vmatpush.bf16.msra.mxu0 %v236
      %278 = vmatmul.bf16.gmra.mxu0 %v268
      %v279 = vpop.f32.mrf.mxu0
      %v280 = vadd.f32 0.0, %v279
      %v281 = vpop.f32.mrf.mxu0
      %282 = vdwg.mxu0
      %v284 = vsel %vm230, %v225, 0
      %286 = vmatpush.bf16.msra.mxu0 0
      %287 = vmatpush.bf16.msra.mxu0 0
      %288 = vmatpush.bf16.msra.mxu0 0
      %289 = vmatpush.bf16.msra.mxu0 0
      %290 = vmatpush.bf16.msra.mxu0 0
      %291 = vmatpush.bf16.msra.mxu0 0
      %292 = vmatpush.bf16.msra.mxu0 0
      %293 = vmatpush.bf16.msra.mxu0 %v236
      %294 = vmatmul.bf16.gmra.mxu0 %v284
      %v295 = vpop.f32.mrf.mxu0
      %v296 = vadd.f32 0.0, %v295
      %v297 = vpop.f32.mrf.mxu0
      %298 = vdwg.mxu0
      %v300 = vsel %vm230, %v226, 0
      %302 = vmatpush.bf16.msra.mxu0 0
      %303 = vmatpush.bf16.msra.mxu0 0
      %304 = vmatpush.bf16.msra.mxu0 0
      %305 = vmatpush.bf16.msra.mxu0 0
      %306 = vmatpush.bf16.msra.mxu0 0
      %307 = vmatpush.bf16.msra.mxu0 0
      %308 = vmatpush.bf16.msra.mxu0 0
      %309 = vmatpush.bf16.msra.mxu0 %v236
      %310 = vmatmul.bf16.gmra.mxu0 %v300
      %v311 = vpop.f32.mrf.mxu0
      %v312 = vadd.f32 0.0, %v311
      %v313 = vpop.f32.mrf.mxu0
      %314 = vdwg.mxu0
      %v316 = vsel %vm230, %v227, 0
      %318 = vmatpush.bf16.msra.mxu0 0
      %319 = vmatpush.bf16.msra.mxu0 0
      %320 = vmatpush.bf16.msra.mxu0 0
      %321 = vmatpush.bf16.msra.mxu0 0
      %322 = vmatpush.bf16.msra.mxu0 0
      %323 = vmatpush.bf16.msra.mxu0 0
      %324 = vmatpush.bf16.msra.mxu0 0
      %325 = vmatpush.bf16.msra.mxu0 %v236
      %326 = vmatmul.bf16.gmra.mxu0 %v316
      %v327 = vpop.f32.mrf.mxu0
      %v328 = vadd.f32 0.0, %v327
      %v329 = vpop.f32.mrf.mxu0
      %330 = vdwg.mxu0
      %v332 = vsel %vm230, %v228, 0
      %334 = vmatpush.bf16.msra.mxu0 0
      %335 = vmatpush.bf16.msra.mxu0 0
      %336 = vmatpush.bf16.msra.mxu0 0
      %337 = vmatpush.bf16.msra.mxu0 0
      %338 = vmatpush.bf16.msra.mxu0 0
      %339 = vmatpush.bf16.msra.mxu0 0
      %340 = vmatpush.bf16.msra.mxu0 0
      %341 = vmatpush.bf16.msra.mxu0 %v236
      %342 = vmatmul.bf16.gmra.mxu0 %v332
      %v343 = vpop.f32.mrf.mxu0
      %v344 = vadd.f32 0.0, %v343
      %v345 = vpop.f32.mrf.mxu0
      %346 = vdwg.mxu0
      %v348 = vsel %vm230, %v229, 0
      %350 = vmatpush.bf16.msra.mxu0 0
      %351 = vmatpush.bf16.msra.mxu0 0
      %352 = vmatpush.bf16.msra.mxu0 0
      %353 = vmatpush.bf16.msra.mxu0 0
      %354 = vmatpush.bf16.msra.mxu0 0
      %355 = vmatpush.bf16.msra.mxu0 0
      %356 = vmatpush.bf16.msra.mxu0 0
      %357 = vmatpush.bf16.msra.mxu0 %v236
      %358 = vmatmul.bf16.gmra.mxu0 %v348
      %v359 = vpop.f32.mrf.mxu0
      %v360 = vadd.f32 0.0, %v359
      %v361 = vpop.f32.mrf.mxu0
      %362 = vdwg.mxu0
      %v363 = vpack.c.bf16 %v248, %v248
      %v364 = vpack.c.bf16 %v264, %v264
      %v365 = vpack.c.bf16 %v280, %v280
      %v366 = vpack.c.bf16 %v296, %v296
      %v367 = vpack.c.bf16 %v312, %v312
      %v368 = vpack.c.bf16 %v328, %v328
      %v369 = vpack.c.bf16 %v344, %v344
      %v370 = vpack.c.bf16 %v360, %v360
      %v373 = vunpack.c.l.b16 %v220
      %v374 = vunpack.c.l.b16 %v221
      %v375 = vpack.c.b16 %v374, %v373
      %v377 = vsel %vm230, %v375, 0
      %v380 = vsel %vm234, %v363, 0
      %382 = vmatpush.bf16.msra.mxu0 0
      %383 = vmatpush.bf16.msra.mxu0 0
      %384 = vmatpush.bf16.msra.mxu0 0
      %385 = vmatpush.bf16.msra.mxu0 0
      %386 = vmatpush.bf16.msra.mxu0 0
      %387 = vmatpush.bf16.msra.mxu0 0
      %388 = vmatpush.bf16.msra.mxu0 0
      %389 = vmatpush.bf16.msra.mxu0 %v380
      %390 = vmatmul.bf16.gmra.mxu0 %v377
      %v391 = vpop.f32.mrf.mxu0
      %v392 = vadd.f32 0.0, %v391
      %v393 = vpop.f32.mrf.mxu0
      %v394 = vadd.f32 0.0, %v393
      %395 = vdwg.mxu0
      %v397 = vsel %vm234, %v364, 0
      %399 = vmatpush.bf16.msra.mxu0 0
      %400 = vmatpush.bf16.msra.mxu0 0
      %401 = vmatpush.bf16.msra.mxu0 0
      %402 = vmatpush.bf16.msra.mxu0 0
      %403 = vmatpush.bf16.msra.mxu0 0
      %404 = vmatpush.bf16.msra.mxu0 0
      %405 = vmatpush.bf16.msra.mxu0 0
      %406 = vmatpush.bf16.msra.mxu0 %v397
      %407 = vmatmul.bf16.gmra.mxu0 %v377
      %v408 = vpop.f32.mrf.mxu0
      %v409 = vadd.f32 0.0, %v408
      %v410 = vpop.f32.mrf.mxu0
      %v411 = vadd.f32 0.0, %v410
      %412 = vdwg.mxu0
      %v414 = vsel %vm234, %v365, 0
      %416 = vmatpush.bf16.msra.mxu0 0
      %417 = vmatpush.bf16.msra.mxu0 0
      %418 = vmatpush.bf16.msra.mxu0 0
      %419 = vmatpush.bf16.msra.mxu0 0
      %420 = vmatpush.bf16.msra.mxu0 0
      %421 = vmatpush.bf16.msra.mxu0 0
      %422 = vmatpush.bf16.msra.mxu0 0
      %423 = vmatpush.bf16.msra.mxu0 %v414
      %424 = vmatmul.bf16.gmra.mxu0 %v377
      %v425 = vpop.f32.mrf.mxu0
      %v426 = vadd.f32 0.0, %v425
      %v427 = vpop.f32.mrf.mxu0
      %v428 = vadd.f32 0.0, %v427
      %429 = vdwg.mxu0
      %v431 = vsel %vm234, %v366, 0
      %433 = vmatpush.bf16.msra.mxu0 0
      %434 = vmatpush.bf16.msra.mxu0 0
      %435 = vmatpush.bf16.msra.mxu0 0
      %436 = vmatpush.bf16.msra.mxu0 0
      %437 = vmatpush.bf16.msra.mxu0 0
      %438 = vmatpush.bf16.msra.mxu0 0
      %439 = vmatpush.bf16.msra.mxu0 0
      %440 = vmatpush.bf16.msra.mxu0 %v431
      %441 = vmatmul.bf16.gmra.mxu0 %v377
      %v442 = vpop.f32.mrf.mxu0
      %v443 = vadd.f32 0.0, %v442
      %v444 = vpop.f32.mrf.mxu0
      %v445 = vadd.f32 0.0, %v444
      %446 = vdwg.mxu0
      %v448 = vsel %vm234, %v367, 0
      %450 = vmatpush.bf16.msra.mxu0 0
      %451 = vmatpush.bf16.msra.mxu0 0
      %452 = vmatpush.bf16.msra.mxu0 0
      %453 = vmatpush.bf16.msra.mxu0 0
      %454 = vmatpush.bf16.msra.mxu0 0
      %455 = vmatpush.bf16.msra.mxu0 0
      %456 = vmatpush.bf16.msra.mxu0 0
      %457 = vmatpush.bf16.msra.mxu0 %v448
      %458 = vmatmul.bf16.gmra.mxu0 %v377
      %v459 = vpop.f32.mrf.mxu0
      %v460 = vadd.f32 0.0, %v459
      %v461 = vpop.f32.mrf.mxu0
      %v462 = vadd.f32 0.0, %v461
      %463 = vdwg.mxu0
      %v465 = vsel %vm234, %v368, 0
      %467 = vmatpush.bf16.msra.mxu0 0
      %468 = vmatpush.bf16.msra.mxu0 0
      %469 = vmatpush.bf16.msra.mxu0 0
      %470 = vmatpush.bf16.msra.mxu0 0
      %471 = vmatpush.bf16.msra.mxu0 0
      %472 = vmatpush.bf16.msra.mxu0 0
      %473 = vmatpush.bf16.msra.mxu0 0
      %474 = vmatpush.bf16.msra.mxu0 %v465
      %475 = vmatmul.bf16.gmra.mxu0 %v377
      %v476 = vpop.f32.mrf.mxu0
      %v477 = vadd.f32 0.0, %v476
      %v478 = vpop.f32.mrf.mxu0
      %v479 = vadd.f32 0.0, %v478
      %480 = vdwg.mxu0
      %v482 = vsel %vm234, %v369, 0
      %484 = vmatpush.bf16.msra.mxu0 0
      %485 = vmatpush.bf16.msra.mxu0 0
      %486 = vmatpush.bf16.msra.mxu0 0
      %487 = vmatpush.bf16.msra.mxu0 0
      %488 = vmatpush.bf16.msra.mxu0 0
      %489 = vmatpush.bf16.msra.mxu0 0
      %490 = vmatpush.bf16.msra.mxu0 0
      %491 = vmatpush.bf16.msra.mxu0 %v482
      %492 = vmatmul.bf16.gmra.mxu0 %v377
      %v493 = vpop.f32.mrf.mxu0
      %v494 = vadd.f32 0.0, %v493
      %v495 = vpop.f32.mrf.mxu0
      %v496 = vadd.f32 0.0, %v495
      %497 = vdwg.mxu0
      %v499 = vsel %vm234, %v370, 0
      %501 = vmatpush.bf16.msra.mxu0 0
      %502 = vmatpush.bf16.msra.mxu0 0
      %503 = vmatpush.bf16.msra.mxu0 0
      %504 = vmatpush.bf16.msra.mxu0 0
      %505 = vmatpush.bf16.msra.mxu0 0
      %506 = vmatpush.bf16.msra.mxu0 0
      %507 = vmatpush.bf16.msra.mxu0 0
      %508 = vmatpush.bf16.msra.mxu0 %v499
      %509 = vmatmul.bf16.gmra.mxu0 %v377
      %v510 = vpop.f32.mrf.mxu0
      %v511 = vadd.f32 0.0, %v510
      %v512 = vpop.f32.mrf.mxu0
      %v513 = vadd.f32 0.0, %v512
      %514 = vdwg.mxu0
      %vm515 = vcmask 130048
      %516 = vst.msk [vmem:[%s217] sm:$0xff] %vm515, %v392
      %517 = vst.msk [vmem:[%s217 + $0x8] sm:$0xff] %vm515, %v394
      %518 = vst.msk [vmem:[%s217 + $0x10] sm:$0xff] %vm515, %v409
      %519 = vst.msk [vmem:[%s217 + $0x18] sm:$0xff] %vm515, %v411
      %520 = vst.msk [vmem:[%s217 + $0x20] sm:$0xff] %vm515, %v426
      %521 = vst.msk [vmem:[%s217 + $0x28] sm:$0xff] %vm515, %v428
      %522 = vst.msk [vmem:[%s217 + $0x30] sm:$0xff] %vm515, %v443
      %523 = vst.msk [vmem:[%s217 + $0x38] sm:$0xff] %vm515, %v445
      %524 = vst.msk [vmem:[%s217 + $0x40] sm:$0xff] %vm515, %v460
      %525 = vst.msk [vmem:[%s217 + $0x48] sm:$0xff] %vm515, %v462
      %526 = vst.msk [vmem:[%s217 + $0x50] sm:$0xff] %vm515, %v477
      %527 = vst.msk [vmem:[%s217 + $0x58] sm:$0xff] %vm515, %v479
      %528 = vst.msk [vmem:[%s217 + $0x60] sm:$0xff] %vm515, %v494
      %529 = vst.msk [vmem:[%s217 + $0x68] sm:$0xff] %vm515, %v496
      %530 = vst.msk [vmem:[%s217 + $0x70] sm:$0xff] %vm515, %v511
      %531 = vst.msk [vmem:[%s217 + $0x78] sm:$0xff] %vm515, %v513
      %v532 = vld [vmem:[%s212] sm:$0xf]
      %v533 = vld [vmem:[%s212 + $0x4] sm:$0xf]
      %v534 = vld [vmem:[%s212 + $0x8] sm:$0xf]
      %v535 = vld [vmem:[%s212 + $0xc] sm:$0xf]
      %v536 = vld [vmem:[%s212 + $0x10] sm:$0xf]
      %v537 = vld [vmem:[%s212 + $0x14] sm:$0xf]
      %v538 = vld [vmem:[%s212 + $0x18] sm:$0xf]
      %v539 = vld [vmem:[%s212 + $0x1c] sm:$0xf]
      %v541 = vsel %vm230, %v532, 0
      %543 = vmatpush.bf16.msra.mxu0 0
      %544 = vmatpush.bf16.msra.mxu0 0
      %545 = vmatpush.bf16.msra.mxu0 0
      %546 = vmatpush.bf16.msra.mxu0 0
      %547 = vmatpush.bf16.msra.mxu0 0
      %548 = vmatpush.bf16.msra.mxu0 0
      %549 = vmatpush.bf16.msra.mxu0 0
      %550 = vmatpush.bf16.msra.mxu0 %v236
      %551 = vmatmul.bf16.gmra.mxu0 %v541
      %v552 = vpop.f32.mrf.mxu0
      %v553 = vadd.f32 0.0, %v552
      %v554 = vpop.f32.mrf.mxu0
      %555 = vdwg.mxu0
      %v557 = vsel %vm230, %v533, 0
      %559 = vmatpush.bf16.msra.mxu0 0
      %560 = vmatpush.bf16.msra.mxu0 0
      %561 = vmatpush.bf16.msra.mxu0 0
      %562 = vmatpush.bf16.msra.mxu0 0
      %563 = vmatpush.bf16.msra.mxu0 0
      %564 = vmatpush.bf16.msra.mxu0 0
      %565 = vmatpush.bf16.msra.mxu0 0
      %566 = vmatpush.bf16.msra.mxu0 %v236
      %567 = vmatmul.bf16.gmra.mxu0 %v557
      %v568 = vpop.f32.mrf.mxu0
      %v569 = vadd.f32 0.0, %v568
      %v570 = vpop.f32.mrf.mxu0
      %571 = vdwg.mxu0
      %v573 = vsel %vm230, %v534, 0
      %575 = vmatpush.bf16.msra.mxu0 0
      %576 = vmatpush.bf16.msra.mxu0 0
      %577 = vmatpush.bf16.msra.mxu0 0
      %578 = vmatpush.bf16.msra.mxu0 0
      %579 = vmatpush.bf16.msra.mxu0 0
      %580 = vmatpush.bf16.msra.mxu0 0
      %581 = vmatpush.bf16.msra.mxu0 0
      %582 = vmatpush.bf16.msra.mxu0 %v236
      %583 = vmatmul.bf16.gmra.mxu0 %v573
      %v584 = vpop.f32.mrf.mxu0
      %v585 = vadd.f32 0.0, %v584
      %v586 = vpop.f32.mrf.mxu0
      %587 = vdwg.mxu0
      %v589 = vsel %vm230, %v535, 0
      %591 = vmatpush.bf16.msra.mxu0 0
      %592 = vmatpush.bf16.msra.mxu0 0
      %593 = vmatpush.bf16.msra.mxu0 0
      %594 = vmatpush.bf16.msra.mxu0 0
      %595 = vmatpush.bf16.msra.mxu0 0
      %596 = vmatpush.bf16.msra.mxu0 0
      %597 = vmatpush.bf16.msra.mxu0 0
      %598 = vmatpush.bf16.msra.mxu0 %v236
      %599 = vmatmul.bf16.gmra.mxu0 %v589
      %v600 = vpop.f32.mrf.mxu0
      %v601 = vadd.f32 0.0, %v600
      %v602 = vpop.f32.mrf.mxu0
      %603 = vdwg.mxu0
      %v605 = vsel %vm230, %v536, 0
      %607 = vmatpush.bf16.msra.mxu0 0
      %608 = vmatpush.bf16.msra.mxu0 0
      %609 = vmatpush.bf16.msra.mxu0 0
      %610 = vmatpush.bf16.msra.mxu0 0
      %611 = vmatpush.bf16.msra.mxu0 0
      %612 = vmatpush.bf16.msra.mxu0 0
      %613 = vmatpush.bf16.msra.mxu0 0
      %614 = vmatpush.bf16.msra.mxu0 %v236
      %615 = vmatmul.bf16.gmra.mxu0 %v605
      %v616 = vpop.f32.mrf.mxu0
      %v617 = vadd.f32 0.0, %v616
      %v618 = vpop.f32.mrf.mxu0
      %619 = vdwg.mxu0
      %v621 = vsel %vm230, %v537, 0
      %623 = vmatpush.bf16.msra.mxu0 0
      %624 = vmatpush.bf16.msra.mxu0 0
      %625 = vmatpush.bf16.msra.mxu0 0
      %626 = vmatpush.bf16.msra.mxu0 0
      %627 = vmatpush.bf16.msra.mxu0 0
      %628 = vmatpush.bf16.msra.mxu0 0
      %629 = vmatpush.bf16.msra.mxu0 0
      %630 = vmatpush.bf16.msra.mxu0 %v236
      %631 = vmatmul.bf16.gmra.mxu0 %v621
      %v632 = vpop.f32.mrf.mxu0
      %v633 = vadd.f32 0.0, %v632
      %v634 = vpop.f32.mrf.mxu0
      %635 = vdwg.mxu0
      %v637 = vsel %vm230, %v538, 0
      %639 = vmatpush.bf16.msra.mxu0 0
      %640 = vmatpush.bf16.msra.mxu0 0
      %641 = vmatpush.bf16.msra.mxu0 0
      %642 = vmatpush.bf16.msra.mxu0 0
      %643 = vmatpush.bf16.msra.mxu0 0
      %644 = vmatpush.bf16.msra.mxu0 0
      %645 = vmatpush.bf16.msra.mxu0 0
      %646 = vmatpush.bf16.msra.mxu0 %v236
      %647 = vmatmul.bf16.gmra.mxu0 %v637
      %v648 = vpop.f32.mrf.mxu0
      %v649 = vadd.f32 0.0, %v648
      %v650 = vpop.f32.mrf.mxu0
      %651 = vdwg.mxu0
      %v653 = vsel %vm230, %v539, 0
      %655 = vmatpush.bf16.msra.mxu0 0
      %656 = vmatpush.bf16.msra.mxu0 0
      %657 = vmatpush.bf16.msra.mxu0 0
      %658 = vmatpush.bf16.msra.mxu0 0
      %659 = vmatpush.bf16.msra.mxu0 0
      %660 = vmatpush.bf16.msra.mxu0 0
      %661 = vmatpush.bf16.msra.mxu0 0
      %662 = vmatpush.bf16.msra.mxu0 %v236
      %663 = vmatmul.bf16.gmra.mxu0 %v653
      %v664 = vpop.f32.mrf.mxu0
      %v665 = vadd.f32 0.0, %v664
      %v666 = vpop.f32.mrf.mxu0
      %667 = vdwg.mxu0
      %v668 = vpack.c.bf16 %v553, %v553
      %v669 = vpack.c.bf16 %v569, %v569
      %v670 = vpack.c.bf16 %v585, %v585
      %v671 = vpack.c.bf16 %v601, %v601
      %v672 = vpack.c.bf16 %v617, %v617
      %v673 = vpack.c.bf16 %v633, %v633
      %v674 = vpack.c.bf16 %v649, %v649
      %v675 = vpack.c.bf16 %v665, %v665
      %v677 = vsel %vm234, %v668, 0
      %679 = vmatpush.bf16.msra.mxu0 0
      %680 = vmatpush.bf16.msra.mxu0 0
      %681 = vmatpush.bf16.msra.mxu0 0
      %682 = vmatpush.bf16.msra.mxu0 0
      %683 = vmatpush.bf16.msra.mxu0 0
      %684 = vmatpush.bf16.msra.mxu0 0
      %685 = vmatpush.bf16.msra.mxu0 0
      %686 = vmatpush.bf16.msra.mxu0 %v677
      %687 = vmatmul.bf16.gmra.mxu0 %v377
      %v688 = vpop.f32.mrf.mxu0
      %v689 = vadd.f32 0.0, %v688
      %v690 = vpop.f32.mrf.mxu0
      %v691 = vadd.f32 0.0, %v690
      %692 = vdwg.mxu0
      %v694 = vsel %vm234, %v669, 0
      %696 = vmatpush.bf16.msra.mxu0 0
      %697 = vmatpush.bf16.msra.mxu0 0
      %698 = vmatpush.bf16.msra.mxu0 0
      %699 = vmatpush.bf16.msra.mxu0 0
      %700 = vmatpush.bf16.msra.mxu0 0
      %701 = vmatpush.bf16.msra.mxu0 0
      %702 = vmatpush.bf16.msra.mxu0 0
      %703 = vmatpush.bf16.msra.mxu0 %v694
      %704 = vmatmul.bf16.gmra.mxu0 %v377
      %v705 = vpop.f32.mrf.mxu0
      %v706 = vadd.f32 0.0, %v705
      %v707 = vpop.f32.mrf.mxu0
      %v708 = vadd.f32 0.0, %v707
      %709 = vdwg.mxu0
      %v711 = vsel %vm234, %v670, 0
      %713 = vmatpush.bf16.msra.mxu0 0
      %714 = vmatpush.bf16.msra.mxu0 0
      %715 = vmatpush.bf16.msra.mxu0 0
      %716 = vmatpush.bf16.msra.mxu0 0
      %717 = vmatpush.bf16.msra.mxu0 0
      %718 = vmatpush.bf16.msra.mxu0 0
      %719 = vmatpush.bf16.msra.mxu0 0
      %720 = vmatpush.bf16.msra.mxu0 %v711
      %721 = vmatmul.bf16.gmra.mxu0 %v377
      %v722 = vpop.f32.mrf.mxu0
      %v723 = vadd.f32 0.0, %v722
      %v724 = vpop.f32.mrf.mxu0
      %v725 = vadd.f32 0.0, %v724
      %726 = vdwg.mxu0
      %v728 = vsel %vm234, %v671, 0
      %730 = vmatpush.bf16.msra.mxu0 0
      %731 = vmatpush.bf16.msra.mxu0 0
      %732 = vmatpush.bf16.msra.mxu0 0
      %733 = vmatpush.bf16.msra.mxu0 0
      %734 = vmatpush.bf16.msra.mxu0 0
      %735 = vmatpush.bf16.msra.mxu0 0
      %736 = vmatpush.bf16.msra.mxu0 0
      %737 = vmatpush.bf16.msra.mxu0 %v728
      %738 = vmatmul.bf16.gmra.mxu0 %v377
      %v739 = vpop.f32.mrf.mxu0
      %v740 = vadd.f32 0.0, %v739
      %v741 = vpop.f32.mrf.mxu0
      %v742 = vadd.f32 0.0, %v741
      %743 = vdwg.mxu0
      %v745 = vsel %vm234, %v672, 0
      %747 = vmatpush.bf16.msra.mxu0 0
      %748 = vmatpush.bf16.msra.mxu0 0
      %749 = vmatpush.bf16.msra.mxu0 0
      %750 = vmatpush.bf16.msra.mxu0 0
      %751 = vmatpush.bf16.msra.mxu0 0
      %752 = vmatpush.bf16.msra.mxu0 0
      %753 = vmatpush.bf16.msra.mxu0 0
      %754 = vmatpush.bf16.msra.mxu0 %v745
      %755 = vmatmul.bf16.gmra.mxu0 %v377
      %v756 = vpop.f32.mrf.mxu0
      %v757 = vadd.f32 0.0, %v756
      %v758 = vpop.f32.mrf.mxu0
      %v759 = vadd.f32 0.0, %v758
      %760 = vdwg.mxu0
      %v762 = vsel %vm234, %v673, 0
      %764 = vmatpush.bf16.msra.mxu0 0
      %765 = vmatpush.bf16.msra.mxu0 0
      %766 = vmatpush.bf16.msra.mxu0 0
      %767 = vmatpush.bf16.msra.mxu0 0
      %768 = vmatpush.bf16.msra.mxu0 0
      %769 = vmatpush.bf16.msra.mxu0 0
      %770 = vmatpush.bf16.msra.mxu0 0
      %771 = vmatpush.bf16.msra.mxu0 %v762
      %772 = vmatmul.bf16.gmra.mxu0 %v377
      %v773 = vpop.f32.mrf.mxu0
      %v774 = vadd.f32 0.0, %v773
      %v775 = vpop.f32.mrf.mxu0
      %v776 = vadd.f32 0.0, %v775
      %777 = vdwg.mxu0
      %v779 = vsel %vm234, %v674, 0
      %781 = vmatpush.bf16.msra.mxu0 0
      %782 = vmatpush.bf16.msra.mxu0 0
      %783 = vmatpush.bf16.msra.mxu0 0
      %784 = vmatpush.bf16.msra.mxu0 0
      %785 = vmatpush.bf16.msra.mxu0 0
      %786 = vmatpush.bf16.msra.mxu0 0
      %787 = vmatpush.bf16.msra.mxu0 0
      %788 = vmatpush.bf16.msra.mxu0 %v779
      %789 = vmatmul.bf16.gmra.mxu0 %v377
      %v790 = vpop.f32.mrf.mxu0
      %v791 = vadd.f32 0.0, %v790
      %v792 = vpop.f32.mrf.mxu0
      %v793 = vadd.f32 0.0, %v792
      %794 = vdwg.mxu0
      %v796 = vsel %vm234, %v675, 0
      %798 = vmatpush.bf16.msra.mxu0 0
      %799 = vmatpush.bf16.msra.mxu0 0
      %800 = vmatpush.bf16.msra.mxu0 0
      %801 = vmatpush.bf16.msra.mxu0 0
      %802 = vmatpush.bf16.msra.mxu0 0
      %803 = vmatpush.bf16.msra.mxu0 0
      %804 = vmatpush.bf16.msra.mxu0 0
      %805 = vmatpush.bf16.msra.mxu0 %v796
      %806 = vmatmul.bf16.gmra.mxu0 %v377
      %v807 = vpop.f32.mrf.mxu0
      %v808 = vadd.f32 0.0, %v807
      %v809 = vpop.f32.mrf.mxu0
      %v810 = vadd.f32 0.0, %v809
      %811 = vdwg.mxu0
      %s812 = scalar_lea.vmem %s217, 128
      %813 = vst.msk [vmem:[%s812] sm:$0xff] %vm515, %v689
      %814 = vst.msk [vmem:[%s812 + $0x8] sm:$0xff] %vm515, %v691
      %815 = vst.msk [vmem:[%s812 + $0x10] sm:$0xff] %vm515, %v706
      %816 = vst.msk [vmem:[%s812 + $0x18] sm:$0xff] %vm515, %v708
      %817 = vst.msk [vmem:[%s812 + $0x20] sm:$0xff] %vm515, %v723
      %818 = vst.msk [vmem:[%s812 + $0x28] sm:$0xff] %vm515, %v725
      %819 = vst.msk [vmem:[%s812 + $0x30] sm:$0xff] %vm515, %v740
      %820 = vst.msk [vmem:[%s812 + $0x38] sm:$0xff] %vm515, %v742
      %821 = vst.msk [vmem:[%s812 + $0x40] sm:$0xff] %vm515, %v757
      %822 = vst.msk [vmem:[%s812 + $0x48] sm:$0xff] %vm515, %v759
      %823 = vst.msk [vmem:[%s812 + $0x50] sm:$0xff] %vm515, %v774
      %824 = vst.msk [vmem:[%s812 + $0x58] sm:$0xff] %vm515, %v776
      %825 = vst.msk [vmem:[%s812 + $0x60] sm:$0xff] %vm515, %v791
      %826 = vst.msk [vmem:[%s812 + $0x68] sm:$0xff] %vm515, %v793
      %827 = vst.msk [vmem:[%s812 + $0x70] sm:$0xff] %vm515, %v808
      %828 = vst.msk [vmem:[%s812 + $0x78] sm:$0xff] %vm515, %v810
      %p829 = scmp.lt.s32.totalorder %s15, 1
      %s830 = scalar_select %p829, %s15, 1
      %s831 = smul.addr %s830, 32
      %s832 = smul.addr %s831, 8
      %s833 = scalar_lea.vmem %s4, %s832
      // Predicated region
      $region37: #{simple_segmentation_forward.9} parent=35 // pred_check
        %p834 = pneg %p127
      $region38: #{simple_segmentation_forward.9} parent=35 // pred_check_branch
        %836 = sbr.rel (%p834) target = $region40
      $region39: #{simple_segmentation_forward.9} parent=35 // pred_region
        _
      $region40: #{simple_segmentation_forward.9} parent=35 // pred_fallthru
        _
    $region36: #{simple_segmentation_forward.9} parent=5 // pred_fallthru
      _
    %p837 = scmp.le.s32.totalorder 2, %s10
    // Predicated region
    $region41: #{simple_segmentation_forward.9} parent=5 // pred_check
      %p838 = pneg %p837
    $region42: #{simple_segmentation_forward.9} parent=5 // pred_check_branch
      %840 = sbr.rel (%p838) target = $region44
    $region43: #{simple_segmentation_forward.9} parent=5 // pred_region
      %s841 = ssub.s32 %s10, 2
      // Predicated region
      $region45: #{simple_segmentation_forward.9} parent=43 // pred_check
        %p842 = pneg %p133
      $region46: #{simple_segmentation_forward.9} parent=43 // pred_check_branch
        %844 = sbr.rel (%p842) target = $region48
      $region47: #{simple_segmentation_forward.9} parent=43 // pred_region
        %p845 = scmp.lt.s32.totalorder %s16, 1
        %s846 = scalar_select %p845, %s16, 1
        %s847 = smul.addr %s846, 32
        %s848 = smul.addr %s847, 8
        %s849 = scalar_lea.vmem %s4, %s848
      $region48: #{simple_segmentation_forward.9} parent=43 // pred_fallthru
        _
    $region44: #{simple_segmentation_forward.9} parent=5 // pred_fallthru
      _
  $region6: #{simple_segmentation_forward.9} parent=0 // loop_footer
    %s14 = sadd.s32 1, %s10
  $region7: #{simple_segmentation_forward.9} parent=0 // loop_footer_branch
    %9 = sbr.rel target = $region3
  $region8: #{simple_segmentation_forward.9} parent=0 // loop_exit
    _

</llo_original>
